<compile_context>
chip_gen: v5e
topology: v5e:2x2
jax: 0.10.0
libtpu: 0.0.40
codegen_flags: <defaults>
</compile_context>

<pallas_src>
import functools

import jax
import jax.numpy as jnp
from jax.experimental import pallas as pl
from jax.experimental.pallas import tpu as pltpu


# ----------------------------------------------------------------------------
# Pallas kernels
# ----------------------------------------------------------------------------
def _accumulate_3x3_taps(x_ref, w_ref, H, W):
    """3x3 'same' conv as 9 accumulated shifted matmuls (lane axis = H*W).

    x_ref: (1, C_in, (H+4)*W) block -- input zero-padded by 2 rows top/bottom
           and flattened row-major, so every 3x3 tap is a constant-offset,
           length-H*W slice of the lane axis.
    w_ref: (9, F, C_in) block -- tap-major conv weights (tap index = dh*3+dw).
    Returns the (F, H*W) float32 pre-bias accumulator.
    """
    M = H * W
    xp = x_ref[0]                                          # (C_in, (H+4)*W)
    # Column-in-row index of every output lane; used to zero lanes that
    # wrapped across a row boundary for the +/-1 column shifts.
    col = jax.lax.broadcasted_iota(jnp.int32, (1, M), 1) % W
    not_first_col = col != 0
    not_last_col = col != (W - 1)

    f_out = w_ref.shape[1]
    acc = jnp.zeros((f_out, M), jnp.float32)
    for dh in range(3):
        for dw in range(3):
            start = (dh + 1) * W + (dw - 1)                # static offset
            xs = xp[:, start:start + M]                    # (C_in, M)
            if dw == 0:
                xs = jnp.where(not_first_col, xs, 0.0)
            elif dw == 2:
                xs = jnp.where(not_last_col, xs, 0.0)
            acc = acc + jnp.dot(w_ref[dh * 3 + dw], xs,
                                preferred_element_type=jnp.float32)
    return acc


def _conv3x3_relu_padout_kernel(x_ref, w_ref, b_ref, o_ref, *, H, W):
    """conv3x3 + bias + ReLU; output is emitted directly in the *next* conv's
    padded-and-flattened layout (zeros in the two pad rows on each side)."""
    M = H * W
    acc = _accumulate_3x3_taps(x_ref, w_ref, H, W) + b_ref[...]
    acc = jnp.maximum(acc, 0.0)
    f_out, mp = o_ref.shape[1], o_ref.shape[2]
    o_ref[0] = jnp.zeros((f_out, mp), o_ref.dtype)
    o_ref[0, :, 2 * W:2 * W + M] = acc.astype(o_ref.dtype)


def _conv3x3_sigmoid_fma_kernel(x_ref, w_ref, b_ref, xk_ref, y_ref,
                                out_ref, a_ref, *, H, W):
    """conv3x3 + bias fused with the module epilogue:
    a = sigmoid(logits); out = a * xk + y."""
    logits = _accumulate_3x3_taps(x_ref, w_ref, H, W) + b_ref[...]
    a = jax.nn.sigmoid(logits)                     # EUP slot; hides under MXU
    a_ref[0] = a.astype(a_ref.dtype)
    out_ref[0] = (a * xk_ref[0].astype(jnp.float32)
                  + y_ref[0].astype(jnp.float32)).astype(out_ref.dtype)


# ----------------------------------------------------------------------------
# Pallas wrappers
# ----------------------------------------------------------------------------
def conv3x3_relu_padded(xpad, w_taps, bias_col, H, W):
    """xpad: (B, C_in, (H+4)*W).  Returns (B, F, (H+4)*W) ReLU features in the
    padded layout expected by the next conv (no extra HBM pass needed)."""
    B, c_in, mp = xpad.shape
    f_out = w_taps.shape[1]
    M = H * W
    cost = pl.CostEstimate(
        flops=2 * B * f_out * 9 * c_in * M,
        transcendentals=0,
        bytes_accessed=4 * (B * c_in * mp + 9 * f_out * c_in + f_out
                            + B * f_out * mp))
    return pl.pallas_call(
        functools.partial(_conv3x3_relu_padout_kernel, H=H, W=W),
        out_shape=jax.ShapeDtypeStruct((B, f_out, mp), jnp.float32),
        grid=(B,),
        in_specs=[
            pl.BlockSpec((1, c_in, mp), lambda b: (b, 0, 0)),
            pl.BlockSpec((9, f_out, c_in), lambda b: (0, 0, 0)),
            pl.BlockSpec((f_out, 1), lambda b: (0, 0)),
        ],
        out_specs=pl.BlockSpec((1, f_out, mp), lambda b: (b, 0, 0)),
        compiler_params=pltpu.CompilerParams(
            dimension_semantics=("parallel",)),
        cost_estimate=cost,
    )(xpad, w_taps, bias_col)


def conv3x3_sigmoid_fma(xpad, w_taps, bias_col, xk_flat, y_flat, H, W):
    """Second conv fused with the module epilogue.  Returns (out, a), each
    (B, C_out, H*W) -- NCHW-flattened, lane-dense."""
    B, c_in, mp = xpad.shape
    c_out = w_taps.shape[1]
    M = H * W
    cost = pl.CostEstimate(
        flops=2 * B * c_out * 9 * c_in * M + 3 * B * c_out * M,
        transcendentals=B * c_out * M,
        bytes_accessed=4 * (B * c_in * mp + 9 * c_out * c_in + c_out
                            + 4 * B * c_out * M))
    return pl.pallas_call(
        functools.partial(_conv3x3_sigmoid_fma_kernel, H=H, W=W),
        out_shape=(jax.ShapeDtypeStruct((B, c_out, M), jnp.float32),
                   jax.ShapeDtypeStruct((B, c_out, M), jnp.float32)),
        grid=(B,),
        in_specs=[
            pl.BlockSpec((1, c_in, mp), lambda b: (b, 0, 0)),
            pl.BlockSpec((9, c_out, c_in), lambda b: (0, 0, 0)),
            pl.BlockSpec((c_out, 1), lambda b: (0, 0)),
            pl.BlockSpec((1, c_out, M), lambda b: (b, 0, 0)),
            pl.BlockSpec((1, c_out, M), lambda b: (b, 0, 0)),
        ],
        out_specs=(pl.BlockSpec((1, c_out, M), lambda b: (b, 0, 0)),
                   pl.BlockSpec((1, c_out, M), lambda b: (b, 0, 0))),
        compiler_params=pltpu.CompilerParams(
            dimension_semantics=("parallel",)),
        cost_estimate=cost,
    )(xpad, w_taps, bias_col, xk_flat, y_flat)


# ----------------------------------------------------------------------------
# Glue (plain JAX): row padding, weight reshapes
# ----------------------------------------------------------------------------
def pad_rows_and_flatten(x_nchw):
    """(B, C, H, W) -> (B, C, (H+4)*W): zero-pad 2 rows top/bottom, flatten."""
    B, C, H, W = x_nchw.shape
    xp = jnp.pad(x_nchw, ((0, 0), (0, 0), (2, 2), (0, 0)))
    return xp.reshape(B, C, (H + 4) * W)


def torch_conv_weight_to_taps(w_fckk):
    """PyTorch conv weight (F, C, 3, 3) -> tap-major (9, F, C)."""
    f_out, c_in, kh, kw = w_fckk.shape
    return jnp.transpose(w_fckk.reshape(f_out, c_in, kh * kw), (2, 0, 1))


def cheby_sum_block_3dab(x, y, xk, params):
    """Forward of ChebySumBlock3DAB (adb_type='triple' stand-in).

    x, y, xk: (B, 3, H, W) float32. Returns (a * xk + y, a), both (B, 3, H, W).
    """
    B, C, H, W = x.shape
    M = H * W
    # est_a stand-in: concat -> conv3x3 -> ReLU -> conv3x3 -> sigmoid
    cat = jnp.concatenate([x, y, xk], axis=1)              # (B, 9, H, W)
    catp = pad_rows_and_flatten(cat)                       # (B, 9, (H+4)*W)
    h1p = conv3x3_relu_padded(catp, params["w1_taps"], params["b1_col"], H, W)
    out_flat, a_flat = conv3x3_sigmoid_fma(
        h1p, params["w2_taps"], params["b2_col"],
        xk.reshape(B, C, M), y.reshape(B, C, M), H, W)
    return out_flat.reshape(B, C, H, W), a_flat.reshape(B, C, H, W)


# ----------------------------------------------------------------------------
# Pure-JAX reference (for correctness check)
# ----------------------------------------------------------------------------
def reference_forward(x, y, xk, params):
    def conv(inp, w, b):
        o = jax.lax.conv_general_dilated(
            inp, w, window_strides=(1, 1), padding="SAME",
            dimension_numbers=("NCHW", "OIHW", "NCHW"),
            precision=jax.lax.Precision.HIGHEST)
        return o + b.reshape(1, -1, 1, 1)

    cat = jnp.concatenate([x, y, xk], axis=1)
    h = jax.nn.relu(conv(cat, params["w1"], params["b1"]))
    a = jax.nn.sigmoid(conv(h, params["w2"], params["b2"]))
    return a * xk + y, a


# ----------------------------------------------------------------------------
if __name__ == "__main__":
    key = jax.random.PRNGKey(0)
    B, C, H, W = 2, 3, 16, 16
    num_feature = 32

    k_x, k_y, k_xk, k_w1, k_b1, k_w2, k_b2 = jax.random.split(key, 7)
    x = jax.random.normal(k_x, (B, C, H, W), jnp.float32)
    y = jax.random.normal(k_y, (B, C, H, W), jnp.float32)
    xk = jax.random.normal(k_xk, (B, C, H, W), jnp.float32)

    # Deterministic parameter init (PyTorch conv weight layout: F, C_in, 3, 3)
    w1 = 0.1 * jax.random.normal(k_w1, (num_feature, 3 * C, 3, 3), jnp.float32)
    b1 = 0.05 * jax.random.normal(k_b1, (num_feature,), jnp.float32)
    w2 = 0.1 * jax.random.normal(k_w2, (C, num_feature, 3, 3), jnp.float32)
    b2 = 0.05 * jax.random.normal(k_b2, (C,), jnp.float32)

    params = {
        "w1": w1, "b1": b1, "w2": w2, "b2": b2,
        "w1_taps": torch_conv_weight_to_taps(w1),
        "b1_col": b1.reshape(num_feature, 1),
        "w2_taps": torch_conv_weight_to_taps(w2),
        "b2_col": b2.reshape(C, 1),
    }

    out, a = jax.jit(cheby_sum_block_3dab)(x, y, xk, params)
    out = jax.block_until_ready(out)
    a = jax.block_until_ready(a)

    ref_out, ref_a = reference_forward(x, y, xk, params)
    assert out.shape == (B, C, H, W) and a.shape == (B, C, H, W)
    # f32 operands / f32 accumulation: tolerance tightened 10x vs. previous
    # revision (margin kept for MXU multi-pass f32 rounding differences).
    assert jnp.allclose(out, ref_out, atol=5e-3, rtol=5e-3), (
        float(jnp.max(jnp.abs(out - ref_out))))
    assert jnp.allclose(a, ref_a, atol=5e-3, rtol=5e-3), (
        float(jnp.max(jnp.abs(a - ref_a))))

    print("KERNEL_OK")
</pallas_src>

<mosaic_0001>
module attributes {stable_mosaic.version = 11 : i64} {
  func.func @_conv3x3_relu_padout_kernel(%arg0: i32, %arg1: memref<1x9x320xf32, #tpu.memory_space<vmem>>, %arg2: memref<9x32x9xf32, #tpu.memory_space<vmem>>, %arg3: memref<32x1xf32, #tpu.memory_space<vmem>>, %arg4: memref<1x32x320xf32, #tpu.memory_space<vmem>>) attributes {dimension_semantics = [#tpu.dimension_semantics<parallel>], iteration_bounds = array<i64: 2>, scalar_prefetch = 0 : i64, scratch_operands = 0 : i64, tpu.core_type = #tpu.core_type<tc>, window_params = [{transform_indices = @transform_0, window_bounds = array<i64: 1, 9, 320>}, {pipeline_mode = #tpu.pipeline_mode<synchronous>, transform_indices = @transform_1, window_bounds = array<i64: 9, 32, 9>}, {pipeline_mode = #tpu.pipeline_mode<synchronous>, transform_indices = @transform_2, window_bounds = array<i64: 32, 1>}, {transform_indices = @transform_3, window_bounds = array<i64: 1, 32, 320>}]} {
    %c0 = arith.constant 0 : index
    %c0_0 = arith.constant 0 : index
    %c0_1 = arith.constant 0 : index
    %0 = vector.load %arg1[%c0, %c0_0, %c0_1] : memref<1x9x320xf32, #tpu.memory_space<vmem>>, vector<1x9x320xf32>
    %1 = vector.shape_cast %0 : vector<1x9x320xf32> to vector<9x320xf32>
    %2 = tpu.iota {dimensions = array<i32: 1>} : vector<1x256xi32>
    %c16_i32 = arith.constant 16 : i32
    %c0_i32 = arith.constant 0 : i32
    %3 = arith.cmpi eq, %c16_i32, %c0_i32 : i32
    %c1_i32 = arith.constant 1 : i32
    %4 = arith.select %3, %c1_i32, %c16_i32 : i32
    %5 = vector.broadcast %4 : i32 to vector<1x256xi32>
    %6 = arith.remsi %2, %5 : vector<1x256xi32>
    %c0_i32_2 = arith.constant 0 : i32
    %7 = vector.broadcast %c0_i32_2 : i32 to vector<1x256xi32>
    %8 = arith.cmpi ne, %6, %7 : vector<1x256xi32>
    %c0_i32_3 = arith.constant 0 : i32
    %9 = vector.broadcast %c0_i32_3 : i32 to vector<1x256xi32>
    %10 = arith.cmpi slt, %6, %9 : vector<1x256xi32>
    %c0_i32_4 = arith.constant 0 : i32
    %11 = arith.cmpi slt, %4, %c0_i32_4 : i32
    %12 = vector.broadcast %11 : i1 to vector<1x256xi1>
    %13 = vector.broadcast %12 : vector<1x256xi1> to vector<1x256xi1>
    %14 = arith.xori %10, %13 : vector<1x256xi1>
    %15 = arith.andi %14, %8 : vector<1x256xi1>
    %16 = vector.broadcast %4 : i32 to vector<1x256xi32>
    %17 = arith.addi %6, %16 : vector<1x256xi32>
    %18 = arith.select %15, %17, %6 : vector<1x256xi1>, vector<1x256xi32>
    %c0_i32_5 = arith.constant 0 : i32
    %19 = vector.broadcast %c0_i32_5 : i32 to vector<1x256xi32>
    %20 = arith.cmpi ne, %18, %19 : vector<1x256xi32>
    %c15_i32 = arith.constant 15 : i32
    %21 = vector.broadcast %c15_i32 : i32 to vector<1x256xi32>
    %22 = arith.cmpi ne, %18, %21 : vector<1x256xi32>
    %cst = arith.constant 0.000000e+00 : f32
    %23 = vector.broadcast %cst : f32 to vector<32x256xf32>
    %24 = vector.extract_strided_slice %1 {offsets = [0, 15], sizes = [9, 256], strides = [1, 1]} : vector<9x320xf32> to vector<9x256xf32>
    %cst_6 = arith.constant 0.000000e+00 : f32
    %25 = vector.shape_cast %20 : vector<1x256xi1> to vector<1x256xi1>
    %26 = vector.broadcast %25 : vector<1x256xi1> to vector<9x256xi1>
    %27 = vector.broadcast %cst_6 : f32 to vector<9x256xf32>
    %28 = arith.select %26, %24, %27 : vector<9x256xi1>, vector<9x256xf32>
    %c0_7 = arith.constant 0 : index
    %c0_8 = arith.constant 0 : index
    %c0_9 = arith.constant 0 : index
    %29 = vector.load %arg2[%c0_7, %c0_8, %c0_9] : memref<9x32x9xf32, #tpu.memory_space<vmem>>, vector<1x32x9xf32>
    %30 = vector.shape_cast %29 : vector<1x32x9xf32> to vector<32x9xf32>
    %cst_10 = arith.constant dense<0.000000e+00> : vector<32x256xf32>
    %31 = tpu.matmul %30, %28, %cst_10 {dimension_numbers = #tpu.dot_dimension_numbers<[1], [0], [0], [1], [0, 0, 1, 1], [], []>} : vector<32x9xf32>, vector<9x256xf32>, vector<32x256xf32> -> vector<32x256xf32>
    %32 = arith.addf %23, %31 : vector<32x256xf32>
    %33 = vector.extract_strided_slice %1 {offsets = [0, 16], sizes = [9, 256], strides = [1, 1]} : vector<9x320xf32> to vector<9x256xf32>
    %c1 = arith.constant 1 : index
    %c0_11 = arith.constant 0 : index
    %c0_12 = arith.constant 0 : index
    %34 = vector.load %arg2[%c1, %c0_11, %c0_12] : memref<9x32x9xf32, #tpu.memory_space<vmem>>, vector<1x32x9xf32>
    %35 = vector.shape_cast %34 : vector<1x32x9xf32> to vector<32x9xf32>
    %cst_13 = arith.constant dense<0.000000e+00> : vector<32x256xf32>
    %36 = tpu.matmul %35, %33, %cst_13 {dimension_numbers = #tpu.dot_dimension_numbers<[1], [0], [0], [1], [0, 0, 1, 1], [], []>} : vector<32x9xf32>, vector<9x256xf32>, vector<32x256xf32> -> vector<32x256xf32>
    %37 = arith.addf %32, %36 : vector<32x256xf32>
    %38 = vector.extract_strided_slice %1 {offsets = [0, 17], sizes = [9, 256], strides = [1, 1]} : vector<9x320xf32> to vector<9x256xf32>
    %cst_14 = arith.constant 0.000000e+00 : f32
    %39 = vector.shape_cast %22 : vector<1x256xi1> to vector<1x256xi1>
    %40 = vector.broadcast %39 : vector<1x256xi1> to vector<9x256xi1>
    %41 = vector.broadcast %cst_14 : f32 to vector<9x256xf32>
    %42 = arith.select %40, %38, %41 : vector<9x256xi1>, vector<9x256xf32>
    %c2 = arith.constant 2 : index
    %c0_15 = arith.constant 0 : index
    %c0_16 = arith.constant 0 : index
    %43 = vector.load %arg2[%c2, %c0_15, %c0_16] : memref<9x32x9xf32, #tpu.memory_space<vmem>>, vector<1x32x9xf32>
    %44 = vector.shape_cast %43 : vector<1x32x9xf32> to vector<32x9xf32>
    %cst_17 = arith.constant dense<0.000000e+00> : vector<32x256xf32>
    %45 = tpu.matmul %44, %42, %cst_17 {dimension_numbers = #tpu.dot_dimension_numbers<[1], [0], [0], [1], [0, 0, 1, 1], [], []>} : vector<32x9xf32>, vector<9x256xf32>, vector<32x256xf32> -> vector<32x256xf32>
    %46 = arith.addf %37, %45 : vector<32x256xf32>
    %47 = vector.extract_strided_slice %1 {offsets = [0, 31], sizes = [9, 256], strides = [1, 1]} : vector<9x320xf32> to vector<9x256xf32>
    %cst_18 = arith.constant 0.000000e+00 : f32
    %48 = vector.shape_cast %20 : vector<1x256xi1> to vector<1x256xi1>
    %49 = vector.broadcast %48 : vector<1x256xi1> to vector<9x256xi1>
    %50 = vector.broadcast %cst_18 : f32 to vector<9x256xf32>
    %51 = arith.select %49, %47, %50 : vector<9x256xi1>, vector<9x256xf32>
    %c3 = arith.constant 3 : index
    %c0_19 = arith.constant 0 : index
    %c0_20 = arith.constant 0 : index
    %52 = vector.load %arg2[%c3, %c0_19, %c0_20] : memref<9x32x9xf32, #tpu.memory_space<vmem>>, vector<1x32x9xf32>
    %53 = vector.shape_cast %52 : vector<1x32x9xf32> to vector<32x9xf32>
    %cst_21 = arith.constant dense<0.000000e+00> : vector<32x256xf32>
    %54 = tpu.matmul %53, %51, %cst_21 {dimension_numbers = #tpu.dot_dimension_numbers<[1], [0], [0], [1], [0, 0, 1, 1], [], []>} : vector<32x9xf32>, vector<9x256xf32>, vector<32x256xf32> -> vector<32x256xf32>
    %55 = arith.addf %46, %54 : vector<32x256xf32>
    %56 = vector.extract_strided_slice %1 {offsets = [0, 32], sizes = [9, 256], strides = [1, 1]} : vector<9x320xf32> to vector<9x256xf32>
    %c4 = arith.constant 4 : index
    %c0_22 = arith.constant 0 : index
    %c0_23 = arith.constant 0 : index
    %57 = vector.load %arg2[%c4, %c0_22, %c0_23] : memref<9x32x9xf32, #tpu.memory_space<vmem>>, vector<1x32x9xf32>
    %58 = vector.shape_cast %57 : vector<1x32x9xf32> to vector<32x9xf32>
    %cst_24 = arith.constant dense<0.000000e+00> : vector<32x256xf32>
    %59 = tpu.matmul %58, %56, %cst_24 {dimension_numbers = #tpu.dot_dimension_numbers<[1], [0], [0], [1], [0, 0, 1, 1], [], []>} : vector<32x9xf32>, vector<9x256xf32>, vector<32x256xf32> -> vector<32x256xf32>
    %60 = arith.addf %55, %59 : vector<32x256xf32>
    %61 = vector.extract_strided_slice %1 {offsets = [0, 33], sizes = [9, 256], strides = [1, 1]} : vector<9x320xf32> to vector<9x256xf32>
    %cst_25 = arith.constant 0.000000e+00 : f32
    %62 = vector.shape_cast %22 : vector<1x256xi1> to vector<1x256xi1>
    %63 = vector.broadcast %62 : vector<1x256xi1> to vector<9x256xi1>
    %64 = vector.broadcast %cst_25 : f32 to vector<9x256xf32>
    %65 = arith.select %63, %61, %64 : vector<9x256xi1>, vector<9x256xf32>
    %c5 = arith.constant 5 : index
    %c0_26 = arith.constant 0 : index
    %c0_27 = arith.constant 0 : index
    %66 = vector.load %arg2[%c5, %c0_26, %c0_27] : memref<9x32x9xf32, #tpu.memory_space<vmem>>, vector<1x32x9xf32>
    %67 = vector.shape_cast %66 : vector<1x32x9xf32> to vector<32x9xf32>
    %cst_28 = arith.constant dense<0.000000e+00> : vector<32x256xf32>
    %68 = tpu.matmul %67, %65, %cst_28 {dimension_numbers = #tpu.dot_dimension_numbers<[1], [0], [0], [1], [0, 0, 1, 1], [], []>} : vector<32x9xf32>, vector<9x256xf32>, vector<32x256xf32> -> vector<32x256xf32>
    %69 = arith.addf %60, %68 : vector<32x256xf32>
    %70 = vector.extract_strided_slice %1 {offsets = [0, 47], sizes = [9, 256], strides = [1, 1]} : vector<9x320xf32> to vector<9x256xf32>
    %cst_29 = arith.constant 0.000000e+00 : f32
    %71 = vector.shape_cast %20 : vector<1x256xi1> to vector<1x256xi1>
    %72 = vector.broadcast %71 : vector<1x256xi1> to vector<9x256xi1>
    %73 = vector.broadcast %cst_29 : f32 to vector<9x256xf32>
    %74 = arith.select %72, %70, %73 : vector<9x256xi1>, vector<9x256xf32>
    %c6 = arith.constant 6 : index
    %c0_30 = arith.constant 0 : index
    %c0_31 = arith.constant 0 : index
    %75 = vector.load %arg2[%c6, %c0_30, %c0_31] : memref<9x32x9xf32, #tpu.memory_space<vmem>>, vector<1x32x9xf32>
    %76 = vector.shape_cast %75 : vector<1x32x9xf32> to vector<32x9xf32>
    %cst_32 = arith.constant dense<0.000000e+00> : vector<32x256xf32>
    %77 = tpu.matmul %76, %74, %cst_32 {dimension_numbers = #tpu.dot_dimension_numbers<[1], [0], [0], [1], [0, 0, 1, 1], [], []>} : vector<32x9xf32>, vector<9x256xf32>, vector<32x256xf32> -> vector<32x256xf32>
    %78 = arith.addf %69, %77 : vector<32x256xf32>
    %79 = vector.extract_strided_slice %1 {offsets = [0, 48], sizes = [9, 256], strides = [1, 1]} : vector<9x320xf32> to vector<9x256xf32>
    %c7 = arith.constant 7 : index
    %c0_33 = arith.constant 0 : index
    %c0_34 = arith.constant 0 : index
    %80 = vector.load %arg2[%c7, %c0_33, %c0_34] : memref<9x32x9xf32, #tpu.memory_space<vmem>>, vector<1x32x9xf32>
    %81 = vector.shape_cast %80 : vector<1x32x9xf32> to vector<32x9xf32>
    %cst_35 = arith.constant dense<0.000000e+00> : vector<32x256xf32>
    %82 = tpu.matmul %81, %79, %cst_35 {dimension_numbers = #tpu.dot_dimension_numbers<[1], [0], [0], [1], [0, 0, 1, 1], [], []>} : vector<32x9xf32>, vector<9x256xf32>, vector<32x256xf32> -> vector<32x256xf32>
    %83 = arith.addf %78, %82 : vector<32x256xf32>
    %84 = vector.extract_strided_slice %1 {offsets = [0, 49], sizes = [9, 256], strides = [1, 1]} : vector<9x320xf32> to vector<9x256xf32>
    %cst_36 = arith.constant 0.000000e+00 : f32
    %85 = vector.shape_cast %22 : vector<1x256xi1> to vector<1x256xi1>
    %86 = vector.broadcast %85 : vector<1x256xi1> to vector<9x256xi1>
    %87 = vector.broadcast %cst_36 : f32 to vector<9x256xf32>
    %88 = arith.select %86, %84, %87 : vector<9x256xi1>, vector<9x256xf32>
    %c8 = arith.constant 8 : index
    %c0_37 = arith.constant 0 : index
    %c0_38 = arith.constant 0 : index
    %89 = vector.load %arg2[%c8, %c0_37, %c0_38] : memref<9x32x9xf32, #tpu.memory_space<vmem>>, vector<1x32x9xf32>
    %90 = vector.shape_cast %89 : vector<1x32x9xf32> to vector<32x9xf32>
    %cst_39 = arith.constant dense<0.000000e+00> : vector<32x256xf32>
    %91 = tpu.matmul %90, %88, %cst_39 {dimension_numbers = #tpu.dot_dimension_numbers<[1], [0], [0], [1], [0, 0, 1, 1], [], []>} : vector<32x9xf32>, vector<9x256xf32>, vector<32x256xf32> -> vector<32x256xf32>
    %92 = arith.addf %83, %91 : vector<32x256xf32>
    %c0_40 = arith.constant 0 : index
    %c0_41 = arith.constant 0 : index
    %93 = vector.load %arg3[%c0_40, %c0_41] : memref<32x1xf32, #tpu.memory_space<vmem>>, vector<32x1xf32>
    %94 = vector.broadcast %93 : vector<32x1xf32> to vector<32x256xf32>
    %95 = arith.addf %92, %94 : vector<32x256xf32>
    %cst_42 = arith.constant 0.000000e+00 : f32
    %96 = vector.broadcast %cst_42 : f32 to vector<32x256xf32>
    %97 = arith.maximumf %95, %96 : vector<32x256xf32>
    %cst_43 = arith.constant 0.000000e+00 : f32
    %98 = vector.broadcast %cst_43 : f32 to vector<32x320xf32>
    %c0_44 = arith.constant 0 : index
    %c0_45 = arith.constant 0 : index
    %c0_46 = arith.constant 0 : index
    %99 = vector.load %arg4[%c0_44, %c0_45, %c0_46] : memref<1x32x320xf32, #tpu.memory_space<vmem>>, vector<1x32x320xf32>
    %100 = vector.shape_cast %99 : vector<1x32x320xf32> to vector<32x320xf32>
    %101 = vector.shape_cast %98 : vector<32x320xf32> to vector<1x32x320xf32>
    tpu.vector_store %arg4[%c0_44, %c0_45, %c0_46], %101 {strides = array<i32>} : memref<1x32x320xf32, #tpu.memory_space<vmem>>, vector<1x32x320xf32>,
    %c0_47 = arith.constant 0 : index
    %c0_48 = arith.constant 0 : index
    %c32 = arith.constant 32 : index
    %102 = vector.load %arg4[%c0_47, %c0_48, %c32] : memref<1x32x320xf32, #tpu.memory_space<vmem>>, vector<1x32x256xf32>
    %103 = vector.shape_cast %102 : vector<1x32x256xf32> to vector<32x256xf32>
    %104 = vector.shape_cast %97 : vector<32x256xf32> to vector<1x32x256xf32>
    tpu.vector_store %arg4[%c0_47, %c0_48, %c32], %104 {strides = array<i32>} : memref<1x32x320xf32, #tpu.memory_space<vmem>>, vector<1x32x256xf32>,
    return
  }
  func.func @transform_0(%arg0: i32) -> (i32, i32, i32) {
    %c0_i32 = arith.constant 0 : i32
    %c0_i32_0 = arith.constant 0 : i32
    %c0_i32_1 = arith.constant 0 : i32
    return %arg0, %c0_i32, %c0_i32_0 : i32, i32, i32
  }
  func.func @transform_1(%arg0: i32) -> (i32, i32, i32) {
    %c0_i32 = arith.constant 0 : i32
    %c0_i32_0 = arith.constant 0 : i32
    %c0_i32_1 = arith.constant 0 : i32
    %c0_i32_2 = arith.constant 0 : i32
    return %c0_i32, %c0_i32_0, %c0_i32_1 : i32, i32, i32
  }
  func.func @transform_2(%arg0: i32) -> (i32, i32) {
    %c0_i32 = arith.constant 0 : i32
    %c0_i32_0 = arith.constant 0 : i32
    %c0_i32_1 = arith.constant 0 : i32
    return %c0_i32, %c0_i32_0 : i32, i32
  }
  func.func @transform_3(%arg0: i32) -> (i32, i32, i32) {
    %c0_i32 = arith.constant 0 : i32
    %c0_i32_0 = arith.constant 0 : i32
    %c0_i32_1 = arith.constant 0 : i32
    return %arg0, %c0_i32, %c0_i32_0 : i32, i32, i32
  }
}

module attributes {stable_mosaic.version = 11 : i64} {
  func.func @_conv3x3_sigmoid_fma_kernel(%arg0: i32, %arg1: memref<1x32x320xf32, #tpu.memory_space<vmem>>, %arg2: memref<9x3x32xf32, #tpu.memory_space<vmem>>, %arg3: memref<3x1xf32, #tpu.memory_space<vmem>>, %arg4: memref<1x3x256xf32, #tpu.memory_space<vmem>>, %arg5: memref<1x3x256xf32, #tpu.memory_space<vmem>>, %arg6: memref<1x3x256xf32, #tpu.memory_space<vmem>>, %arg7: memref<1x3x256xf32, #tpu.memory_space<vmem>>) attributes {dimension_semantics = [#tpu.dimension_semantics<parallel>], iteration_bounds = array<i64: 2>, scalar_prefetch = 0 : i64, scratch_operands = 0 : i64, tpu.core_type = #tpu.core_type<tc>, window_params = [{transform_indices = @transform_0, window_bounds = array<i64: 1, 32, 320>}, {pipeline_mode = #tpu.pipeline_mode<synchronous>, transform_indices = @transform_1, window_bounds = array<i64: 9, 3, 32>}, {pipeline_mode = #tpu.pipeline_mode<synchronous>, transform_indices = @transform_2, window_bounds = array<i64: 3, 1>}, {transform_indices = @transform_3, window_bounds = array<i64: 1, 3, 256>}, {transform_indices = @transform_4, window_bounds = array<i64: 1, 3, 256>}, {transform_indices = @transform_5, window_bounds = array<i64: 1, 3, 256>}, {transform_indices = @transform_6, window_bounds = array<i64: 1, 3, 256>}]} {
    %c0 = arith.constant 0 : index
    %c0_0 = arith.constant 0 : index
    %c0_1 = arith.constant 0 : index
    %0 = vector.load %arg1[%c0, %c0_0, %c0_1] : memref<1x32x320xf32, #tpu.memory_space<vmem>>, vector<1x32x320xf32>
    %1 = vector.shape_cast %0 : vector<1x32x320xf32> to vector<32x320xf32>
    %2 = tpu.iota {dimensions = array<i32: 1>} : vector<1x256xi32>
    %c16_i32 = arith.constant 16 : i32
    %c0_i32 = arith.constant 0 : i32
    %3 = arith.cmpi eq, %c16_i32, %c0_i32 : i32
    %c1_i32 = arith.constant 1 : i32
    %4 = arith.select %3, %c1_i32, %c16_i32 : i32
    %5 = vector.broadcast %4 : i32 to vector<1x256xi32>
    %6 = arith.remsi %2, %5 : vector<1x256xi32>
    %c0_i32_2 = arith.constant 0 : i32
    %7 = vector.broadcast %c0_i32_2 : i32 to vector<1x256xi32>
    %8 = arith.cmpi ne, %6, %7 : vector<1x256xi32>
    %c0_i32_3 = arith.constant 0 : i32
    %9 = vector.broadcast %c0_i32_3 : i32 to vector<1x256xi32>
    %10 = arith.cmpi slt, %6, %9 : vector<1x256xi32>
    %c0_i32_4 = arith.constant 0 : i32
    %11 = arith.cmpi slt, %4, %c0_i32_4 : i32
    %12 = vector.broadcast %11 : i1 to vector<1x256xi1>
    %13 = vector.broadcast %12 : vector<1x256xi1> to vector<1x256xi1>
    %14 = arith.xori %10, %13 : vector<1x256xi1>
    %15 = arith.andi %14, %8 : vector<1x256xi1>
    %16 = vector.broadcast %4 : i32 to vector<1x256xi32>
    %17 = arith.addi %6, %16 : vector<1x256xi32>
    %18 = arith.select %15, %17, %6 : vector<1x256xi1>, vector<1x256xi32>
    %c0_i32_5 = arith.constant 0 : i32
    %19 = vector.broadcast %c0_i32_5 : i32 to vector<1x256xi32>
    %20 = arith.cmpi ne, %18, %19 : vector<1x256xi32>
    %c15_i32 = arith.constant 15 : i32
    %21 = vector.broadcast %c15_i32 : i32 to vector<1x256xi32>
    %22 = arith.cmpi ne, %18, %21 : vector<1x256xi32>
    %cst = arith.constant 0.000000e+00 : f32
    %23 = vector.broadcast %cst : f32 to vector<3x256xf32>
    %24 = vector.extract_strided_slice %1 {offsets = [0, 15], sizes = [32, 256], strides = [1, 1]} : vector<32x320xf32> to vector<32x256xf32>
    %cst_6 = arith.constant 0.000000e+00 : f32
    %25 = vector.shape_cast %20 : vector<1x256xi1> to vector<1x256xi1>
    %26 = vector.broadcast %25 : vector<1x256xi1> to vector<32x256xi1>
    %27 = vector.broadcast %cst_6 : f32 to vector<32x256xf32>
    %28 = arith.select %26, %24, %27 : vector<32x256xi1>, vector<32x256xf32>
    %c0_7 = arith.constant 0 : index
    %c0_8 = arith.constant 0 : index
    %c0_9 = arith.constant 0 : index
    %29 = vector.load %arg2[%c0_7, %c0_8, %c0_9] : memref<9x3x32xf32, #tpu.memory_space<vmem>>, vector<1x3x32xf32>
    %30 = vector.shape_cast %29 : vector<1x3x32xf32> to vector<3x32xf32>
    %cst_10 = arith.constant dense<0.000000e+00> : vector<3x256xf32>
    %31 = tpu.matmul %30, %28, %cst_10 {dimension_numbers = #tpu.dot_dimension_numbers<[1], [0], [0], [1], [0, 0, 1, 1], [], []>} : vector<3x32xf32>, vector<32x256xf32>, vector<3x256xf32> -> vector<3x256xf32>
    %32 = arith.addf %23, %31 : vector<3x256xf32>
    %33 = vector.extract_strided_slice %1 {offsets = [0, 16], sizes = [32, 256], strides = [1, 1]} : vector<32x320xf32> to vector<32x256xf32>
    %c1 = arith.constant 1 : index
    %c0_11 = arith.constant 0 : index
    %c0_12 = arith.constant 0 : index
    %34 = vector.load %arg2[%c1, %c0_11, %c0_12] : memref<9x3x32xf32, #tpu.memory_space<vmem>>, vector<1x3x32xf32>
    %35 = vector.shape_cast %34 : vector<1x3x32xf32> to vector<3x32xf32>
    %cst_13 = arith.constant dense<0.000000e+00> : vector<3x256xf32>
    %36 = tpu.matmul %35, %33, %cst_13 {dimension_numbers = #tpu.dot_dimension_numbers<[1], [0], [0], [1], [0, 0, 1, 1], [], []>} : vector<3x32xf32>, vector<32x256xf32>, vector<3x256xf32> -> vector<3x256xf32>
    %37 = arith.addf %32, %36 : vector<3x256xf32>
    %38 = vector.extract_strided_slice %1 {offsets = [0, 17], sizes = [32, 256], strides = [1, 1]} : vector<32x320xf32> to vector<32x256xf32>
    %cst_14 = arith.constant 0.000000e+00 : f32
    %39 = vector.shape_cast %22 : vector<1x256xi1> to vector<1x256xi1>
    %40 = vector.broadcast %39 : vector<1x256xi1> to vector<32x256xi1>
    %41 = vector.broadcast %cst_14 : f32 to vector<32x256xf32>
    %42 = arith.select %40, %38, %41 : vector<32x256xi1>, vector<32x256xf32>
    %c2 = arith.constant 2 : index
    %c0_15 = arith.constant 0 : index
    %c0_16 = arith.constant 0 : index
    %43 = vector.load %arg2[%c2, %c0_15, %c0_16] : memref<9x3x32xf32, #tpu.memory_space<vmem>>, vector<1x3x32xf32>
    %44 = vector.shape_cast %43 : vector<1x3x32xf32> to vector<3x32xf32>
    %cst_17 = arith.constant dense<0.000000e+00> : vector<3x256xf32>
    %45 = tpu.matmul %44, %42, %cst_17 {dimension_numbers = #tpu.dot_dimension_numbers<[1], [0], [0], [1], [0, 0, 1, 1], [], []>} : vector<3x32xf32>, vector<32x256xf32>, vector<3x256xf32> -> vector<3x256xf32>
    %46 = arith.addf %37, %45 : vector<3x256xf32>
    %47 = vector.extract_strided_slice %1 {offsets = [0, 31], sizes = [32, 256], strides = [1, 1]} : vector<32x320xf32> to vector<32x256xf32>
    %cst_18 = arith.constant 0.000000e+00 : f32
    %48 = vector.shape_cast %20 : vector<1x256xi1> to vector<1x256xi1>
    %49 = vector.broadcast %48 : vector<1x256xi1> to vector<32x256xi1>
    %50 = vector.broadcast %cst_18 : f32 to vector<32x256xf32>
    %51 = arith.select %49, %47, %50 : vector<32x256xi1>, vector<32x256xf32>
    %c3 = arith.constant 3 : index
    %c0_19 = arith.constant 0 : index
    %c0_20 = arith.constant 0 : index
    %52 = vector.load %arg2[%c3, %c0_19, %c0_20] : memref<9x3x32xf32, #tpu.memory_space<vmem>>, vector<1x3x32xf32>
    %53 = vector.shape_cast %52 : vector<1x3x32xf32> to vector<3x32xf32>
    %cst_21 = arith.constant dense<0.000000e+00> : vector<3x256xf32>
    %54 = tpu.matmul %53, %51, %cst_21 {dimension_numbers = #tpu.dot_dimension_numbers<[1], [0], [0], [1], [0, 0, 1, 1], [], []>} : vector<3x32xf32>, vector<32x256xf32>, vector<3x256xf32> -> vector<3x256xf32>
    %55 = arith.addf %46, %54 : vector<3x256xf32>
    %56 = vector.extract_strided_slice %1 {offsets = [0, 32], sizes = [32, 256], strides = [1, 1]} : vector<32x320xf32> to vector<32x256xf32>
    %c4 = arith.constant 4 : index
    %c0_22 = arith.constant 0 : index
    %c0_23 = arith.constant 0 : index
    %57 = vector.load %arg2[%c4, %c0_22, %c0_23] : memref<9x3x32xf32, #tpu.memory_space<vmem>>, vector<1x3x32xf32>
    %58 = vector.shape_cast %57 : vector<1x3x32xf32> to vector<3x32xf32>
    %cst_24 = arith.constant dense<0.000000e+00> : vector<3x256xf32>
    %59 = tpu.matmul %58, %56, %cst_24 {dimension_numbers = #tpu.dot_dimension_numbers<[1], [0], [0], [1], [0, 0, 1, 1], [], []>} : vector<3x32xf32>, vector<32x256xf32>, vector<3x256xf32> -> vector<3x256xf32>
    %60 = arith.addf %55, %59 : vector<3x256xf32>
    %61 = vector.extract_strided_slice %1 {offsets = [0, 33], sizes = [32, 256], strides = [1, 1]} : vector<32x320xf32> to vector<32x256xf32>
    %cst_25 = arith.constant 0.000000e+00 : f32
    %62 = vector.shape_cast %22 : vector<1x256xi1> to vector<1x256xi1>
    %63 = vector.broadcast %62 : vector<1x256xi1> to vector<32x256xi1>
    %64 = vector.broadcast %cst_25 : f32 to vector<32x256xf32>
    %65 = arith.select %63, %61, %64 : vector<32x256xi1>, vector<32x256xf32>
    %c5 = arith.constant 5 : index
    %c0_26 = arith.constant 0 : index
    %c0_27 = arith.constant 0 : index
    %66 = vector.load %arg2[%c5, %c0_26, %c0_27] : memref<9x3x32xf32, #tpu.memory_space<vmem>>, vector<1x3x32xf32>
    %67 = vector.shape_cast %66 : vector<1x3x32xf32> to vector<3x32xf32>
    %cst_28 = arith.constant dense<0.000000e+00> : vector<3x256xf32>
    %68 = tpu.matmul %67, %65, %cst_28 {dimension_numbers = #tpu.dot_dimension_numbers<[1], [0], [0], [1], [0, 0, 1, 1], [], []>} : vector<3x32xf32>, vector<32x256xf32>, vector<3x256xf32> -> vector<3x256xf32>
    %69 = arith.addf %60, %68 : vector<3x256xf32>
    %70 = vector.extract_strided_slice %1 {offsets = [0, 47], sizes = [32, 256], strides = [1, 1]} : vector<32x320xf32> to vector<32x256xf32>
    %cst_29 = arith.constant 0.000000e+00 : f32
    %71 = vector.shape_cast %20 : vector<1x256xi1> to vector<1x256xi1>
    %72 = vector.broadcast %71 : vector<1x256xi1> to vector<32x256xi1>
    %73 = vector.broadcast %cst_29 : f32 to vector<32x256xf32>
    %74 = arith.select %72, %70, %73 : vector<32x256xi1>, vector<32x256xf32>
    %c6 = arith.constant 6 : index
    %c0_30 = arith.constant 0 : index
    %c0_31 = arith.constant 0 : index
    %75 = vector.load %arg2[%c6, %c0_30, %c0_31] : memref<9x3x32xf32, #tpu.memory_space<vmem>>, vector<1x3x32xf32>
    %76 = vector.shape_cast %75 : vector<1x3x32xf32> to vector<3x32xf32>
    %cst_32 = arith.constant dense<0.000000e+00> : vector<3x256xf32>
    %77 = tpu.matmul %76, %74, %cst_32 {dimension_numbers = #tpu.dot_dimension_numbers<[1], [0], [0], [1], [0, 0, 1, 1], [], []>} : vector<3x32xf32>, vector<32x256xf32>, vector<3x256xf32> -> vector<3x256xf32>
    %78 = arith.addf %69, %77 : vector<3x256xf32>
    %79 = vector.extract_strided_slice %1 {offsets = [0, 48], sizes = [32, 256], strides = [1, 1]} : vector<32x320xf32> to vector<32x256xf32>
    %c7 = arith.constant 7 : index
    %c0_33 = arith.constant 0 : index
    %c0_34 = arith.constant 0 : index
    %80 = vector.load %arg2[%c7, %c0_33, %c0_34] : memref<9x3x32xf32, #tpu.memory_space<vmem>>, vector<1x3x32xf32>
    %81 = vector.shape_cast %80 : vector<1x3x32xf32> to vector<3x32xf32>
    %cst_35 = arith.constant dense<0.000000e+00> : vector<3x256xf32>
    %82 = tpu.matmul %81, %79, %cst_35 {dimension_numbers = #tpu.dot_dimension_numbers<[1], [0], [0], [1], [0, 0, 1, 1], [], []>} : vector<3x32xf32>, vector<32x256xf32>, vector<3x256xf32> -> vector<3x256xf32>
    %83 = arith.addf %78, %82 : vector<3x256xf32>
    %84 = vector.extract_strided_slice %1 {offsets = [0, 49], sizes = [32, 256], strides = [1, 1]} : vector<32x320xf32> to vector<32x256xf32>
    %cst_36 = arith.constant 0.000000e+00 : f32
    %85 = vector.shape_cast %22 : vector<1x256xi1> to vector<1x256xi1>
    %86 = vector.broadcast %85 : vector<1x256xi1> to vector<32x256xi1>
    %87 = vector.broadcast %cst_36 : f32 to vector<32x256xf32>
    %88 = arith.select %86, %84, %87 : vector<32x256xi1>, vector<32x256xf32>
    %c8 = arith.constant 8 : index
    %c0_37 = arith.constant 0 : index
    %c0_38 = arith.constant 0 : index
    %89 = vector.load %arg2[%c8, %c0_37, %c0_38] : memref<9x3x32xf32, #tpu.memory_space<vmem>>, vector<1x3x32xf32>
    %90 = vector.shape_cast %89 : vector<1x3x32xf32> to vector<3x32xf32>
    %cst_39 = arith.constant dense<0.000000e+00> : vector<3x256xf32>
    %91 = tpu.matmul %90, %88, %cst_39 {dimension_numbers = #tpu.dot_dimension_numbers<[1], [0], [0], [1], [0, 0, 1, 1], [], []>} : vector<3x32xf32>, vector<32x256xf32>, vector<3x256xf32> -> vector<3x256xf32>
    %92 = arith.addf %83, %91 : vector<3x256xf32>
    %c0_40 = arith.constant 0 : index
    %c0_41 = arith.constant 0 : index
    %93 = vector.load %arg3[%c0_40, %c0_41] : memref<3x1xf32, #tpu.memory_space<vmem>>, vector<3x1xf32>
    %94 = vector.broadcast %93 : vector<3x1xf32> to vector<3x256xf32>
    %95 = arith.addf %92, %94 : vector<3x256xf32>
    %96 = arith.negf %95 : vector<3x256xf32>
    %97 = math.exp %96 : vector<3x256xf32>
    %cst_42 = arith.constant 1.000000e+00 : f32
    %98 = vector.broadcast %cst_42 : f32 to vector<3x256xf32>
    %99 = arith.addf %98, %97 : vector<3x256xf32>
    %100 = arith.divf %98, %99 : vector<3x256xf32>
    %c0_43 = arith.constant 0 : index
    %c0_44 = arith.constant 0 : index
    %c0_45 = arith.constant 0 : index
    %101 = vector.load %arg7[%c0_43, %c0_44, %c0_45] : memref<1x3x256xf32, #tpu.memory_space<vmem>>, vector<1x3x256xf32>
    %102 = vector.shape_cast %101 : vector<1x3x256xf32> to vector<3x256xf32>
    %103 = vector.shape_cast %100 : vector<3x256xf32> to vector<1x3x256xf32>
    tpu.vector_store %arg7[%c0_43, %c0_44, %c0_45], %103 {strides = array<i32>} : memref<1x3x256xf32, #tpu.memory_space<vmem>>, vector<1x3x256xf32>,
    %c0_46 = arith.constant 0 : index
    %c0_47 = arith.constant 0 : index
    %c0_48 = arith.constant 0 : index
    %104 = vector.load %arg4[%c0_46, %c0_47, %c0_48] : memref<1x3x256xf32, #tpu.memory_space<vmem>>, vector<1x3x256xf32>
    %105 = vector.shape_cast %104 : vector<1x3x256xf32> to vector<3x256xf32>
    %106 = arith.mulf %100, %105 : vector<3x256xf32>
    %c0_49 = arith.constant 0 : index
    %c0_50 = arith.constant 0 : index
    %c0_51 = arith.constant 0 : index
    %107 = vector.load %arg5[%c0_49, %c0_50, %c0_51] : memref<1x3x256xf32, #tpu.memory_space<vmem>>, vector<1x3x256xf32>
    %108 = vector.shape_cast %107 : vector<1x3x256xf32> to vector<3x256xf32>
    %109 = arith.addf %106, %108 : vector<3x256xf32>
    %c0_52 = arith.constant 0 : index
    %c0_53 = arith.constant 0 : index
    %c0_54 = arith.constant 0 : index
    %110 = vector.load %arg6[%c0_52, %c0_53, %c0_54] : memref<1x3x256xf32, #tpu.memory_space<vmem>>, vector<1x3x256xf32>
    %111 = vector.shape_cast %110 : vector<1x3x256xf32> to vector<3x256xf32>
    %112 = vector.shape_cast %109 : vector<3x256xf32> to vector<1x3x256xf32>
    tpu.vector_store %arg6[%c0_52, %c0_53, %c0_54], %112 {strides = array<i32>} : memref<1x3x256xf32, #tpu.memory_space<vmem>>, vector<1x3x256xf32>,
    return
  }
  func.func @transform_0(%arg0: i32) -> (i32, i32, i32) {
    %c0_i32 = arith.constant 0 : i32
    %c0_i32_0 = arith.constant 0 : i32
    %c0_i32_1 = arith.constant 0 : i32
    return %arg0, %c0_i32, %c0_i32_0 : i32, i32, i32
  }
  func.func @transform_1(%arg0: i32) -> (i32, i32, i32) {
    %c0_i32 = arith.constant 0 : i32
    %c0_i32_0 = arith.constant 0 : i32
    %c0_i32_1 = arith.constant 0 : i32
    %c0_i32_2 = arith.constant 0 : i32
    return %c0_i32, %c0_i32_0, %c0_i32_1 : i32, i32, i32
  }
  func.func @transform_2(%arg0: i32) -> (i32, i32) {
    %c0_i32 = arith.constant 0 : i32
    %c0_i32_0 = arith.constant 0 : i32
    %c0_i32_1 = arith.constant 0 : i32
    return %c0_i32, %c0_i32_0 : i32, i32
  }
  func.func @transform_3(%arg0: i32) -> (i32, i32, i32) {
    %c0_i32 = arith.constant 0 : i32
    %c0_i32_0 = arith.constant 0 : i32
    %c0_i32_1 = arith.constant 0 : i32
    return %arg0, %c0_i32, %c0_i32_0 : i32, i32, i32
  }
  func.func @transform_4(%arg0: i32) -> (i32, i32, i32) {
    %c0_i32 = arith.constant 0 : i32
    %c0_i32_0 = arith.constant 0 : i32
    %c0_i32_1 = arith.constant 0 : i32
    return %arg0, %c0_i32, %c0_i32_0 : i32, i32, i32
  }
  func.func @transform_5(%arg0: i32) -> (i32, i32, i32) {
    %c0_i32 = arith.constant 0 : i32
    %c0_i32_0 = arith.constant 0 : i32
    %c0_i32_1 = arith.constant 0 : i32
    return %arg0, %c0_i32, %c0_i32_0 : i32, i32, i32
  }
  func.func @transform_6(%arg0: i32) -> (i32, i32, i32) {
    %c0_i32 = arith.constant 0 : i32
    %c0_i32_0 = arith.constant 0 : i32
    %c0_i32_1 = arith.constant 0 : i32
    return %arg0, %c0_i32, %c0_i32_0 : i32, i32, i32
  }
}

</mosaic_0001>

<llo_original>
// kernel: cheby_sum_block_3dab.3
$region0: #{cheby_sum_block_3dab.3}
  #allocation0 [shape = 'u32[]', space=smem, size = 0x4, offset = 0x4, fixed_abs, tag = 'smem constant byte address 0x4 - core index']
  #allocation1 [shape = 'u32[72,128]{1,0:T(1,128)}', space=vmem, size = 0x9000, scoped, tag = 'internal scratch']
  %s0 = inlined_call_operand.vmem [shape: f32[2,32,320], index: 0, kind: input, shape index: {}]
  %s1 = inlined_call_operand.vmem [shape: f32[9,3,32], index: 1, kind: input, shape index: {}]
  %s2 = inlined_call_operand.vmem [shape: f32[3,1], index: 2, kind: input, shape index: {}]
  %s3 = inlined_call_operand.vmem [shape: f32[2,3,256], index: 3, kind: input, shape index: {}]
  %s4 = inlined_call_operand.vmem [shape: f32[2,3,256], index: 4, kind: input, shape index: {}]
  %s5 = inlined_call_operand.vmem [shape: f32[2,3,256], index: 5, kind: output, shape index: {0}]
  %s6 = inlined_call_operand.vmem [shape: f32[2,3,256], index: 6, kind: output, shape index: {1}]
  %7 = xla_tuple %s5, %s6
  %s8 = sld [smem:[#allocation0]]
  $region61: #{cheby_sum_block_3dab.3} parent=0
    _
  %s10 = ssub.s32 1, %s8
  %s11 = scalar_select 0, %s10, %s8
  loop: start=0, step=1, limit=4
  $region2: #{cheby_sum_block_3dab.3} parent=0 // loop_pre_header
    _
  $region3: #{cheby_sum_block_3dab.3} parent=0 // loop_header
    %s13 = sphi 0, %s17
    %p14 = scmp.ge.s32.totalorder %s13, 4
    %s23 = sphi 0, %s25
    %s26 = sphi 0, %s23
    %s27 = sphi 0, %s26
    %s43 = sphi 0, %s27
    %s47 = sphi 0, %s47
    %s49 = sphi 0, %s47
    %s50 = sphi 0, %s49
    %s64 = sphi 0, %s50
    %s68 = sphi 0, %s68
    %s70 = sphi 0, %s68
    %s71 = sphi 0, %s70
    %s85 = sphi 0, %s71
    %s91 = sphi 0, %s93
    %s94 = sphi 0, %s91
    %s95 = sphi 0, %s94
    %s111 = sphi 0, %s95
    %s117 = sphi 0, %s119
    %s120 = sphi 0, %s117
    %s121 = sphi 0, %s120
    %s137 = sphi 0, %s121
    %s143 = sphi 0, %s145
    %s146 = sphi 0, %s143
    %s147 = sphi 0, %s146
    %s163 = sphi 0, %s147
    %s169 = sphi 0, %s171
    %s172 = sphi 0, %s169
    %s173 = sphi 0, %s172
    %s189 = sphi 0, %s173
  $region4: #{cheby_sum_block_3dab.3} parent=0 // loop_header_branch
    %16 = sbr.rel (%p14) target = $region8
  $region5: #{cheby_sum_block_3dab.3} parent=0 // loop_body
    %s18 = ssub.s32 %s13, 1
    %s19 = ssub.s32 %s13, 2
    %s20 = sadd.s32 %s13, 1
    %s21 = ssub.s32 %s13, %s20
    %p22 = scmp.eq.s32.totalorder %s21, 0
    %s24 = sadd.s32 %s23, 1
    %s25 = scalar_select %p22, %s23, %s24
    %p28 = pneg %p22
    %p29 = scmp.eq.s32.totalorder %s13, 1
    %p30 = por %p28, %p29
    %p31 = scmp.ne.s32.totalorder %s23, %s26
    %p32 = scmp.eq.s32.totalorder %s13, 0
    %p33 = por %p31, %p32
    %p34 = scmp.ne.s32.totalorder %s23, %s26
    %p35 = scmp.eq.s32.totalorder %s18, 1
    %p36 = por %p34, %p35
    %p37 = scmp.ne.s32.totalorder %s26, %s27
    %p38 = scmp.eq.s32.totalorder %s18, 0
    %p39 = por %p37, %p38
    %p40 = scmp.ne.s32.totalorder %s26, %s27
    %p41 = scmp.eq.s32.totalorder %s19, 1
    %p42 = por %p40, %p41
    %p44 = scmp.ne.s32.totalorder %s27, %s43
    %p45 = scmp.eq.s32.totalorder %s19, 0
    %p46 = por %p44, %p45
    %s48 = sadd.s32 %s47, 1
    %p51 = scmp.eq.s32.totalorder %s13, 1
    %p52 = scmp.ne.s32.totalorder %s47, %s49
    %p53 = scmp.eq.s32.totalorder %s13, 0
    %p54 = por %p52, %p53
    %p55 = scmp.ne.s32.totalorder %s47, %s49
    %p56 = scmp.eq.s32.totalorder %s18, 1
    %p57 = por %p55, %p56
    %p58 = scmp.ne.s32.totalorder %s49, %s50
    %p59 = scmp.eq.s32.totalorder %s18, 0
    %p60 = por %p58, %p59
    %p61 = scmp.ne.s32.totalorder %s49, %s50
    %p62 = scmp.eq.s32.totalorder %s19, 1
    %p63 = por %p61, %p62
    %p65 = scmp.ne.s32.totalorder %s50, %s64
    %p66 = scmp.eq.s32.totalorder %s19, 0
    %p67 = por %p65, %p66
    %s69 = sadd.s32 %s68, 1
    %p72 = scmp.eq.s32.totalorder %s13, 1
    %p73 = scmp.ne.s32.totalorder %s68, %s70
    %p74 = scmp.eq.s32.totalorder %s13, 0
    %p75 = por %p73, %p74
    %p76 = scmp.ne.s32.totalorder %s68, %s70
    %p77 = scmp.eq.s32.totalorder %s18, 1
    %p78 = por %p76, %p77
    %p79 = scmp.ne.s32.totalorder %s70, %s71
    %p80 = scmp.eq.s32.totalorder %s18, 0
    %p81 = por %p79, %p80
    %p82 = scmp.ne.s32.totalorder %s70, %s71
    %p83 = scmp.eq.s32.totalorder %s19, 1
    %p84 = por %p82, %p83
    %p86 = scmp.ne.s32.totalorder %s71, %s85
    %p87 = scmp.eq.s32.totalorder %s19, 0
    %p88 = por %p86, %p87
    %s89 = ssub.s32 %s13, %s20
    %p90 = scmp.eq.s32.totalorder %s89, 0
    %s92 = sadd.s32 %s91, 1
    %s93 = scalar_select %p90, %s91, %s92
    %p96 = pneg %p90
    %p97 = scmp.eq.s32.totalorder %s13, 1
    %p98 = por %p96, %p97
    %p99 = scmp.ne.s32.totalorder %s91, %s94
    %p100 = scmp.eq.s32.totalorder %s13, 0
    %p101 = por %p99, %p100
    %p102 = scmp.ne.s32.totalorder %s91, %s94
    %p103 = scmp.eq.s32.totalorder %s18, 1
    %p104 = por %p102, %p103
    %p105 = scmp.ne.s32.totalorder %s94, %s95
    %p106 = scmp.eq.s32.totalorder %s18, 0
    %p107 = por %p105, %p106
    %p108 = scmp.ne.s32.totalorder %s94, %s95
    %p109 = scmp.eq.s32.totalorder %s19, 1
    %p110 = por %p108, %p109
    %p112 = scmp.ne.s32.totalorder %s95, %s111
    %p113 = scmp.eq.s32.totalorder %s19, 0
    %p114 = por %p112, %p113
    %s115 = ssub.s32 %s13, %s20
    %p116 = scmp.eq.s32.totalorder %s115, 0
    %s118 = sadd.s32 %s117, 1
    %s119 = scalar_select %p116, %s117, %s118
    %p122 = pneg %p116
    %p123 = scmp.eq.s32.totalorder %s13, 1
    %p124 = por %p122, %p123
    %p125 = scmp.ne.s32.totalorder %s117, %s120
    %p126 = scmp.eq.s32.totalorder %s13, 0
    %p127 = por %p125, %p126
    %p128 = scmp.ne.s32.totalorder %s117, %s120
    %p129 = scmp.eq.s32.totalorder %s18, 1
    %p130 = por %p128, %p129
    %p131 = scmp.ne.s32.totalorder %s120, %s121
    %p132 = scmp.eq.s32.totalorder %s18, 0
    %p133 = por %p131, %p132
    %p134 = scmp.ne.s32.totalorder %s120, %s121
    %p135 = scmp.eq.s32.totalorder %s19, 1
    %p136 = por %p134, %p135
    %p138 = scmp.ne.s32.totalorder %s121, %s137
    %p139 = scmp.eq.s32.totalorder %s19, 0
    %p140 = por %p138, %p139
    %s141 = ssub.s32 %s13, %s20
    %p142 = scmp.eq.s32.totalorder %s141, 0
    %s144 = sadd.s32 %s143, 1
    %s145 = scalar_select %p142, %s143, %s144
    %p148 = pneg %p142
    %p149 = scmp.eq.s32.totalorder %s13, 1
    %p150 = por %p148, %p149
    %p151 = scmp.ne.s32.totalorder %s143, %s146
    %p152 = scmp.eq.s32.totalorder %s13, 0
    %p153 = por %p151, %p152
    %p154 = scmp.ne.s32.totalorder %s143, %s146
    %p155 = scmp.eq.s32.totalorder %s18, 1
    %p156 = por %p154, %p155
    %p157 = scmp.ne.s32.totalorder %s146, %s147
    %p158 = scmp.eq.s32.totalorder %s18, 0
    %p159 = por %p157, %p158
    %p160 = scmp.ne.s32.totalorder %s146, %s147
    %p161 = scmp.eq.s32.totalorder %s19, 1
    %p162 = por %p160, %p161
    %p164 = scmp.ne.s32.totalorder %s147, %s163
    %p165 = scmp.eq.s32.totalorder %s19, 0
    %p166 = por %p164, %p165
    %s167 = ssub.s32 %s13, %s20
    %p168 = scmp.eq.s32.totalorder %s167, 0
    %s170 = sadd.s32 %s169, 1
    %s171 = scalar_select %p168, %s169, %s170
    %p174 = pneg %p168
    %p175 = scmp.eq.s32.totalorder %s13, 1
    %p176 = por %p174, %p175
    %p177 = scmp.ne.s32.totalorder %s169, %s172
    %p178 = scmp.eq.s32.totalorder %s13, 0
    %p179 = por %p177, %p178
    %p180 = scmp.ne.s32.totalorder %s169, %s172
    %p181 = scmp.eq.s32.totalorder %s18, 1
    %p182 = por %p180, %p181
    %p183 = scmp.ne.s32.totalorder %s172, %s173
    %p184 = scmp.eq.s32.totalorder %s18, 0
    %p185 = por %p183, %p184
    %p186 = scmp.ne.s32.totalorder %s172, %s173
    %p187 = scmp.eq.s32.totalorder %s19, 1
    %p188 = por %p186, %p187
    %p190 = scmp.ne.s32.totalorder %s173, %s189
    %p191 = scmp.eq.s32.totalorder %s19, 0
    %p192 = por %p190, %p191
    %p193 = scmp.le.s32.totalorder 1, %s13
    %p194 = scmp.lt.s32.totalorder %s13, 3
    %p195 = pnand %p193, %p194
    %p196 = pneg %p195
    // Predicated region
    $region9: #{cheby_sum_block_3dab.3} parent=5 // pred_check
      _
    $region10: #{cheby_sum_block_3dab.3} parent=5 // pred_check_branch
      %198 = sbr.rel (%p195) target = $region12
    $region11: #{cheby_sum_block_3dab.3} parent=5 // pred_region
      %s199 = ssub.s32 %s13, 1
      // Predicated region
      $region13: #{cheby_sum_block_3dab.3} parent=11 // pred_check
        %p200 = pneg %p60
      $region14: #{cheby_sum_block_3dab.3} parent=11 // pred_check_branch
        %202 = sbr.rel (%p200) target = $region16
      $region15: #{cheby_sum_block_3dab.3} parent=11 // pred_region
        _
      $region16: #{cheby_sum_block_3dab.3} parent=11 // pred_fallthru
        _
      // Predicated region
      $region17: #{cheby_sum_block_3dab.3} parent=11 // pred_check
        %p203 = pneg %p81
      $region18: #{cheby_sum_block_3dab.3} parent=11 // pred_check_branch
        %205 = sbr.rel (%p203) target = $region20
      $region19: #{cheby_sum_block_3dab.3} parent=11 // pred_region
        _
      $region20: #{cheby_sum_block_3dab.3} parent=11 // pred_fallthru
        _
    $region12: #{cheby_sum_block_3dab.3} parent=5 // pred_fallthru
      _
    %p206 = scmp.lt.s32.totalorder %s13, 2
    // Predicated region
    $region21: #{cheby_sum_block_3dab.3} parent=5 // pred_check
      %p207 = pneg %p206
    $region22: #{cheby_sum_block_3dab.3} parent=5 // pred_check_branch
      %209 = sbr.rel (%p207) target = $region24
    $region23: #{cheby_sum_block_3dab.3} parent=5 // pred_region
      // Predicated region
      $region25: #{cheby_sum_block_3dab.3} parent=23 // pred_check
        %p210 = pneg %p33
      $region26: #{cheby_sum_block_3dab.3} parent=23 // pred_check_branch
        %212 = sbr.rel (%p210) target = $region28
      $region27: #{cheby_sum_block_3dab.3} parent=23 // pred_region
        %p213 = scmp.lt.s32.totalorder %s13, 1
        %s214 = scalar_select %p213, %s13, 1
        %s215 = smul.addr %s214, 12
        %s216 = smul.addr %s215, 8
        %s217 = scalar_lea.vmem %s0, %s216
      $region28: #{cheby_sum_block_3dab.3} parent=23 // pred_fallthru
        _
      // Predicated region
      $region29: #{cheby_sum_block_3dab.3} parent=23 // pred_check
        %p218 = pneg %p101
      $region30: #{cheby_sum_block_3dab.3} parent=23 // pred_check_branch
        %220 = sbr.rel (%p218) target = $region32
      $region31: #{cheby_sum_block_3dab.3} parent=23 // pred_region
        %p221 = scmp.lt.s32.totalorder %s13, 1
        %s222 = scalar_select %p221, %s13, 1
        %s223 = smul.addr %s222, 2
        %s224 = smul.addr %s223, 4
        %s225 = scalar_lea.vmem %s3, %s224
      $region32: #{cheby_sum_block_3dab.3} parent=23 // pred_fallthru
        _
      // Predicated region
      $region33: #{cheby_sum_block_3dab.3} parent=23 // pred_check
        %p226 = pneg %p127
      $region34: #{cheby_sum_block_3dab.3} parent=23 // pred_check_branch
        %228 = sbr.rel (%p226) target = $region36
      $region35: #{cheby_sum_block_3dab.3} parent=23 // pred_region
        %p229 = scmp.lt.s32.totalorder %s13, 1
        %s230 = scalar_select %p229, %s13, 1
        %s231 = smul.addr %s230, 2
        %s232 = smul.addr %s231, 4
        %s233 = scalar_lea.vmem %s4, %s232
      $region36: #{cheby_sum_block_3dab.3} parent=23 // pred_fallthru
        _
    $region24: #{cheby_sum_block_3dab.3} parent=5 // pred_fallthru
      _
    %p234 = scmp.le.s32.totalorder 1, %s13
    %p235 = scmp.lt.s32.totalorder %s13, 3
    %p236 = pnand %p234, %p235
    %p237 = pneg %p236
    // Predicated region
    $region37: #{cheby_sum_block_3dab.3} parent=5 // pred_check
      _
    $region38: #{cheby_sum_block_3dab.3} parent=5 // pred_check_branch
      %239 = sbr.rel (%p236) target = $region40
    $region39: #{cheby_sum_block_3dab.3} parent=5 // pred_region
      %s240 = ssub.s32 %s13, 1
      %p241 = scmp.lt.s32.totalorder %s18, 1
      %s242 = scalar_select %p241, %s18, 1
      %s243 = smul.addr %s242, 12
      %s244 = smul.addr %s243, 8
      %s245 = scalar_lea.vmem %s0, %s244
      %p246 = pneg %p39
      %p247 = pneg %p36
      %p248 = pneg %p60
      %p249 = pneg %p57
      %p250 = pneg %p81
      %p251 = pneg %p78
      %p252 = scmp.lt.s32.totalorder %s18, 1
      %s253 = scalar_select %p252, %s18, 1
      %s254 = smul.addr %s253, 2
      %s255 = smul.addr %s254, 4
      %s256 = scalar_lea.vmem %s3, %s255
      %p257 = pneg %p107
      %p258 = pneg %p104
      %p259 = scmp.lt.s32.totalorder %s18, 1
      %s260 = scalar_select %p259, %s18, 1
      %s261 = smul.addr %s260, 2
      %s262 = smul.addr %s261, 4
      %s263 = scalar_lea.vmem %s4, %s262
      %p264 = pneg %p133
      %p265 = pneg %p130
      %p266 = pneg %p159
      %p267 = pneg %p156
      %p268 = scmp.lt.s32.totalorder %s18, 1
      %s269 = scalar_select %p268, %s18, 1
      %s270 = smul.addr %s269, 2
      %s271 = smul.addr %s270, 4
      %s272 = scalar_lea.vmem %s5, %s271
      %p273 = pneg %p185
      %p274 = pneg %p182
      %p275 = scmp.lt.s32.totalorder %s18, 1
      %s276 = scalar_select %p275, %s18, 1
      %s277 = smul.addr %s276, 2
      %s278 = smul.addr %s277, 4
      %s279 = scalar_lea.vmem %s6, %s278
      %p280 = scmp.lt.s32.totalorder %s18, 1
      %s281 = scalar_select %p280, %s18, 1
      %s282 = smul.addr %s281, 12
      %s283 = smul.addr %s282, 8
      %s284 = scalar_lea.vmem %s0, %s283
      %p285 = scmp.lt.s32.totalorder %s18, 1
      %s286 = scalar_select %p285, %s18, 1
      %s287 = smul.addr %s286, 2
      %s288 = smul.addr %s287, 4
      %s289 = scalar_lea.vmem %s3, %s288
      %p290 = scmp.lt.s32.totalorder %s18, 1
      %s291 = scalar_select %p290, %s18, 1
      %s292 = smul.addr %s291, 2
      %s293 = smul.addr %s292, 4
      %s294 = scalar_lea.vmem %s4, %s293
      %p295 = scmp.lt.s32.totalorder %s18, 1
      %s296 = scalar_select %p295, %s18, 1
      %s297 = smul.addr %s296, 2
      %s298 = smul.addr %s297, 4
      %s299 = scalar_lea.vmem %s5, %s298
      %p300 = scmp.lt.s32.totalorder %s18, 1
      %s301 = scalar_select %p300, %s18, 1
      %s302 = smul.addr %s301, 2
      %s303 = smul.addr %s302, 4
      %s304 = scalar_lea.vmem %s6, %s303
      %v305 = vld [vmem:[%s284] sm:$0xff]
      %v306 = vld [vmem:[%s284 + $0x8] sm:$0xff]
      %v307 = vld [vmem:[%s284 + $0x10] sm:$0xff]
      %v308 = vld [vmem:[%s284 + $0x18] sm:$0xff]
      %v309 = vld [vmem:[%s284 + $0x20] sm:$0xff]
      %v310 = vld [vmem:[%s284 + $0x28] sm:$0xff]
      %v311 = vld [vmem:[%s284 + $0x30] sm:$0xff]
      %v312 = vld [vmem:[%s284 + $0x38] sm:$0xff]
      %v313 = vld [vmem:[%s284 + $0x40] sm:$0xff]
      %v314 = vld [vmem:[%s284 + $0x48] sm:$0xff]
      %v315 = vld [vmem:[%s284 + $0x50] sm:$0xff]
      %v316 = vld [vmem:[%s284 + $0x58] sm:$0xff]
      %v317 = vlaneseq
      %v318 = vand.u32 %v317, 127
      %v319 = vadd.s32 %v318, 128
      %vm320 = vcmp.lt.s32.totalorder %v318, 0
      %v321 = vsub.s32 0, %v318
      %v322 = vsel %vm320, %v321, %v318
      %v323 = vshrl.u32 %v322, 4
      %v324 = vand.u32 %v322, 15
      %v325 = vsub.s32 0, %v324
      %v326 = vsel %vm320, %v325, %v324
      %vm327 = vcmp.lt.s32.totalorder %v319, 0
      %v328 = vsub.s32 0, %v319
      %v329 = vsel %vm327, %v328, %v319
      %v330 = vshrl.u32 %v329, 4
      %v331 = vand.u32 %v329, 15
      %v332 = vsub.s32 0, %v331
      %v333 = vsel %vm327, %v332, %v331
      %vm334 = vcmp.ne.s32.totalorder %v326, 0
      %vm335 = vcmp.ne.s32.totalorder %v333, 0
      %vm336 = vcmp.lt.s32.totalorder %v326, 0
      %vm337 = vcmp.lt.s32.totalorder %v333, 0
      %vm338 = vmand %vm336, %vm334
      %vm339 = vmand %vm337, %vm335
      %v340 = vadd.s32 %v326, 16
      %v341 = vadd.s32 %v333, 16
      %v342 = vsel %vm338, %v340, %v326
      %v343 = vsel %vm339, %v341, %v333
      %vm344 = vcmp.ne.s32.totalorder %v342, 0
      %vm345 = vcmp.ne.s32.totalorder %v343, 0
      %vm346 = vcmp.ne.s32.totalorder %v342, 15
      %vm347 = vcmp.ne.s32.totalorder %v343, 15
      %v348 = vsel %vm344, 1, 0
      %v349 = vsel %vm345, 1, 0
      %vm350 = vcmp.eq.s32.totalorder %v348, 1
      %vm351 = vcmp.eq.s32.totalorder %v349, 1
      %364 = vrot.lane.b32.xlu0 %v305, 113
      %v365 = vpop.permute.xlu0 %364
      %366 = vrot.lane.b32.xlu0 %v306, 113
      %v367 = vpop.permute.xlu0 %366
      %368 = vrot.lane.b32.xlu0 %v307, 113
      %v369 = vpop.permute.xlu0 %368
      %370 = vrot.lane.b32.xlu0 %v308, 113
      %v371 = vpop.permute.xlu0 %370
      %372 = vrot.lane.b32.xlu0 %v309, 113
      %v373 = vpop.permute.xlu0 %372
      %374 = vrot.lane.b32.xlu0 %v310, 113
      %v375 = vpop.permute.xlu0 %374
      %376 = vrot.lane.b32.xlu0 %v311, 113
      %v377 = vpop.permute.xlu0 %376
      %378 = vrot.lane.b32.xlu0 %v312, 113
      %v379 = vpop.permute.xlu0 %378
      %380 = vrot.lane.b32.xlu0 %v313, 113
      %v381 = vpop.permute.xlu0 %380
      %382 = vrot.lane.b32.xlu0 %v314, 113
      %v383 = vpop.permute.xlu0 %382
      %384 = vrot.lane.b32.xlu0 %v315, 113
      %v385 = vpop.permute.xlu0 %384
      %386 = vrot.lane.b32.xlu0 %v316, 113
      %v387 = vpop.permute.xlu0 %386
      %vm388 = vcmask 924672
      %v389 = vsel %vm388, %v365, %v367
      %v390 = vsel %vm388, %v367, %v369
      %v391 = vsel %vm388, %v371, %v373
      %v392 = vsel %vm388, %v373, %v375
      %v393 = vsel %vm388, %v377, %v379
      %v394 = vsel %vm388, %v379, %v381
      %v395 = vsel %vm388, %v383, %v385
      %v396 = vsel %vm388, %v385, %v387
      %v405 = vsel %vm350, %v389, 0.0
      %v406 = vsel %vm351, %v390, 0.0
      %v407 = vsel %vm350, %v391, 0.0
      %v408 = vsel %vm351, %v392, 0.0
      %v409 = vsel %vm350, %v393, 0.0
      %v410 = vsel %vm351, %v394, 0.0
      %v411 = vsel %vm350, %v395, 0.0
      %v412 = vsel %vm351, %v396, 0.0
      %v413 = vld [vmem:[%s1] sm:$0x7]
      %s414 = scalar_lea.vmem %s1, 4
      %v415 = vld [vmem:[%s414] sm:$0x7]
      %416 = vrot.lane.b32.xlu0 %v305, 112
      %v417 = vpop.permute.xlu0 %416
      %418 = vrot.lane.b32.xlu0 %v306, 112
      %v419 = vpop.permute.xlu0 %418
      %420 = vrot.lane.b32.xlu0 %v307, 112
      %v421 = vpop.permute.xlu0 %420
      %422 = vrot.lane.b32.xlu0 %v308, 112
      %v423 = vpop.permute.xlu0 %422
      %424 = vrot.lane.b32.xlu0 %v309, 112
      %v425 = vpop.permute.xlu0 %424
      %426 = vrot.lane.b32.xlu0 %v310, 112
      %v427 = vpop.permute.xlu0 %426
      %428 = vrot.lane.b32.xlu0 %v311, 112
      %v429 = vpop.permute.xlu0 %428
      %430 = vrot.lane.b32.xlu0 %v312, 112
      %v431 = vpop.permute.xlu0 %430
      %432 = vrot.lane.b32.xlu0 %v313, 112
      %v433 = vpop.permute.xlu0 %432
      %434 = vrot.lane.b32.xlu0 %v314, 112
      %v435 = vpop.permute.xlu0 %434
      %436 = vrot.lane.b32.xlu0 %v315, 112
      %v437 = vpop.permute.xlu0 %436
      %438 = vrot.lane.b32.xlu0 %v316, 112
      %v439 = vpop.permute.xlu0 %438
      %vm440 = vcmask 916480
      %v441 = vsel %vm440, %v417, %v419
      %v442 = vsel %vm440, %v419, %v421
      %v443 = vsel %vm440, %v423, %v425
      %v444 = vsel %vm440, %v425, %v427
      %v445 = vsel %vm440, %v429, %v431
      %v446 = vsel %vm440, %v431, %v433
      %v447 = vsel %vm440, %v435, %v437
      %v448 = vsel %vm440, %v437, %v439
      %vm457 = vcmask 261120
      %v459 = vsel %vm457, %v415, 0
      %461 = vmatpush.msra.mxu0 0.0
      %462 = vmatpush.msra.mxu0 0.0
      %463 = vmatpush.msra.mxu0 0.0
      %464 = vmatpush.msra.mxu0 0.0
      %465 = vmatpush.msra.mxu0 0.0
      %466 = vmatpush.msra.mxu0 0.0
      %467 = vmatpush.msra.mxu0 0.0
      %468 = vmatpush.msra.mxu0 0.0
      %469 = vmatpush.msra.mxu0 0.0
      %470 = vmatpush.msra.mxu0 0.0
      %471 = vmatpush.msra.mxu0 0.0
      %472 = vmatpush.msra.mxu0 0.0
      %473 = vmatpush.msra.mxu0 %v447
      %474 = vmatpush.msra.mxu0 %v445
      %475 = vmatpush.msra.mxu0 %v443
      %476 = vmatpush.msra.mxu0 %v441
      %477 = vmatmul.f32.gmra.mxu0 %v459
      %v478 = vpop.f32.mrf.mxu0
      %v479 = vadd.f32 0.0, %v478
      %480 = vdwg.mxu0
      %481 = vmatpush.msra.mxu0 0.0
      %482 = vmatpush.msra.mxu0 0.0
      %483 = vmatpush.msra.mxu0 0.0
      %484 = vmatpush.msra.mxu0 0.0
      %485 = vmatpush.msra.mxu0 0.0
      %486 = vmatpush.msra.mxu0 0.0
      %487 = vmatpush.msra.mxu0 0.0
      %488 = vmatpush.msra.mxu0 0.0
      %489 = vmatpush.msra.mxu0 0.0
      %490 = vmatpush.msra.mxu0 0.0
      %491 = vmatpush.msra.mxu0 0.0
      %492 = vmatpush.msra.mxu0 0.0
      %493 = vmatpush.msra.mxu0 %v448
      %494 = vmatpush.msra.mxu0 %v446
      %495 = vmatpush.msra.mxu0 %v444
      %496 = vmatpush.msra.mxu0 %v442
      %497 = vmatmul.f32.gmra.mxu0 %v459
      %v498 = vpop.f32.mrf.mxu0
      %v499 = vadd.f32 0.0, %v498
      %500 = vdwg.mxu0
      %v502 = vsel %vm457, %v413, 0
      %504 = vmatpush.msra.mxu0 0.0
      %505 = vmatpush.msra.mxu0 0.0
      %506 = vmatpush.msra.mxu0 0.0
      %507 = vmatpush.msra.mxu0 0.0
      %508 = vmatpush.msra.mxu0 0.0
      %509 = vmatpush.msra.mxu0 0.0
      %510 = vmatpush.msra.mxu0 0.0
      %511 = vmatpush.msra.mxu0 0.0
      %512 = vmatpush.msra.mxu0 0.0
      %513 = vmatpush.msra.mxu0 0.0
      %514 = vmatpush.msra.mxu0 0.0
      %515 = vmatpush.msra.mxu0 0.0
      %516 = vmatpush.msra.mxu0 %v411
      %517 = vmatpush.msra.mxu0 %v409
      %518 = vmatpush.msra.mxu0 %v407
      %519 = vmatpush.msra.mxu0 %v405
      %520 = vmatmul.f32.gmra.mxu0 %v502
      %v521 = vpop.f32.mrf.mxu0
      %v522 = vadd.f32 %v479, %v521
      %523 = vdwg.mxu0
      %524 = vmatpush.msra.mxu0 0.0
      %525 = vmatpush.msra.mxu0 0.0
      %526 = vmatpush.msra.mxu0 0.0
      %527 = vmatpush.msra.mxu0 0.0
      %528 = vmatpush.msra.mxu0 0.0
      %529 = vmatpush.msra.mxu0 0.0
      %530 = vmatpush.msra.mxu0 0.0
      %531 = vmatpush.msra.mxu0 0.0
      %532 = vmatpush.msra.mxu0 0.0
      %533 = vmatpush.msra.mxu0 0.0
      %534 = vmatpush.msra.mxu0 0.0
      %535 = vmatpush.msra.mxu0 0.0
      %536 = vmatpush.msra.mxu0 %v412
      %537 = vmatpush.msra.mxu0 %v410
      %538 = vmatpush.msra.mxu0 %v408
      %539 = vmatpush.msra.mxu0 %v406
      %540 = vmatmul.f32.gmra.mxu0 %v502
      %v541 = vpop.f32.mrf.mxu0
      %v542 = vadd.f32 %v499, %v541
      %543 = vdwg.mxu0
      %v544 = vsel %vm346, 1, 0
      %v545 = vsel %vm347, 1, 0
      %vm546 = vcmp.eq.s32.totalorder %v544, 1
      %vm547 = vcmp.eq.s32.totalorder %v545, 1
      %548 = vrot.lane.b32.xlu0 %v305, 111
      %v549 = vpop.permute.xlu0 %548
      %550 = vrot.lane.b32.xlu0 %v306, 111
      %v551 = vpop.permute.xlu0 %550
      %552 = vrot.lane.b32.xlu0 %v307, 111
      %v553 = vpop.permute.xlu0 %552
      %554 = vrot.lane.b32.xlu0 %v308, 111
      %v555 = vpop.permute.xlu0 %554
      %556 = vrot.lane.b32.xlu0 %v309, 111
      %v557 = vpop.permute.xlu0 %556
      %558 = vrot.lane.b32.xlu0 %v310, 111
      %v559 = vpop.permute.xlu0 %558
      %560 = vrot.lane.b32.xlu0 %v311, 111
      %v561 = vpop.permute.xlu0 %560
      %562 = vrot.lane.b32.xlu0 %v312, 111
      %v563 = vpop.permute.xlu0 %562
      %564 = vrot.lane.b32.xlu0 %v313, 111
      %v565 = vpop.permute.xlu0 %564
      %566 = vrot.lane.b32.xlu0 %v314, 111
      %v567 = vpop.permute.xlu0 %566
      %568 = vrot.lane.b32.xlu0 %v315, 111
      %v569 = vpop.permute.xlu0 %568
      %570 = vrot.lane.b32.xlu0 %v316, 111
      %v571 = vpop.permute.xlu0 %570
      %vm572 = vcmask 908288
      %v573 = vsel %vm572, %v549, %v551
      %v574 = vsel %vm572, %v551, %v553
      %v575 = vsel %vm572, %v555, %v557
      %v576 = vsel %vm572, %v557, %v559
      %v577 = vsel %vm572, %v561, %v563
      %v578 = vsel %vm572, %v563, %v565
      %v579 = vsel %vm572, %v567, %v569
      %v580 = vsel %vm572, %v569, %v571
      %v589 = vsel %vm546, %v573, 0.0
      %v590 = vsel %vm547, %v574, 0.0
      %v591 = vsel %vm546, %v575, 0.0
      %v592 = vsel %vm547, %v576, 0.0
      %v593 = vsel %vm546, %v577, 0.0
      %v594 = vsel %vm547, %v578, 0.0
      %v595 = vsel %vm546, %v579, 0.0
      %v596 = vsel %vm547, %v580, 0.0
      %s597 = scalar_lea.vmem %s1, 8
      %v598 = vld [vmem:[%s597] sm:$0x7]
      %v600 = vsel %vm457, %v598, 0
      %602 = vmatpush.msra.mxu0 0.0
      %603 = vmatpush.msra.mxu0 0.0
      %604 = vmatpush.msra.mxu0 0.0
      %605 = vmatpush.msra.mxu0 0.0
      %606 = vmatpush.msra.mxu0 0.0
      %607 = vmatpush.msra.mxu0 0.0
      %608 = vmatpush.msra.mxu0 0.0
      %609 = vmatpush.msra.mxu0 0.0
      %610 = vmatpush.msra.mxu0 0.0
      %611 = vmatpush.msra.mxu0 0.0
      %612 = vmatpush.msra.mxu0 0.0
      %613 = vmatpush.msra.mxu0 0.0
      %614 = vmatpush.msra.mxu0 %v595
      %615 = vmatpush.msra.mxu0 %v593
      %616 = vmatpush.msra.mxu0 %v591
      %617 = vmatpush.msra.mxu0 %v589
      %618 = vmatmul.f32.gmra.mxu0 %v600
      %v619 = vpop.f32.mrf.mxu0
      %v620 = vadd.f32 0.0, %v619
      %621 = vdwg.mxu0
      %622 = vmatpush.msra.mxu0 0.0
      %623 = vmatpush.msra.mxu0 0.0
      %624 = vmatpush.msra.mxu0 0.0
      %625 = vmatpush.msra.mxu0 0.0
      %626 = vmatpush.msra.mxu0 0.0
      %627 = vmatpush.msra.mxu0 0.0
      %628 = vmatpush.msra.mxu0 0.0
      %629 = vmatpush.msra.mxu0 0.0
      %630 = vmatpush.msra.mxu0 0.0
      %631 = vmatpush.msra.mxu0 0.0
      %632 = vmatpush.msra.mxu0 0.0
      %633 = vmatpush.msra.mxu0 0.0
      %634 = vmatpush.msra.mxu0 %v596
      %635 = vmatpush.msra.mxu0 %v594
      %636 = vmatpush.msra.mxu0 %v592
      %637 = vmatpush.msra.mxu0 %v590
      %638 = vmatmul.f32.gmra.mxu0 %v600
      %v639 = vpop.f32.mrf.mxu0
      %v640 = vadd.f32 0.0, %v639
      %641 = vdwg.mxu0
      %v642 = vadd.f32 %v522, %v620
      %v643 = vadd.f32 %v542, %v640
      %644 = vrot.lane.b32.xlu0 %v305, 97
      %v645 = vpop.permute.xlu0 %644
      %646 = vrot.lane.b32.xlu0 %v306, 97
      %v647 = vpop.permute.xlu0 %646
      %648 = vrot.lane.b32.xlu0 %v307, 97
      %v649 = vpop.permute.xlu0 %648
      %650 = vrot.lane.b32.xlu0 %v308, 97
      %v651 = vpop.permute.xlu0 %650
      %652 = vrot.lane.b32.xlu0 %v309, 97
      %v653 = vpop.permute.xlu0 %652
      %654 = vrot.lane.b32.xlu0 %v310, 97
      %v655 = vpop.permute.xlu0 %654
      %656 = vrot.lane.b32.xlu0 %v311, 97
      %v657 = vpop.permute.xlu0 %656
      %658 = vrot.lane.b32.xlu0 %v312, 97
      %v659 = vpop.permute.xlu0 %658
      %660 = vrot.lane.b32.xlu0 %v313, 97
      %v661 = vpop.permute.xlu0 %660
      %662 = vrot.lane.b32.xlu0 %v314, 97
      %v663 = vpop.permute.xlu0 %662
      %664 = vrot.lane.b32.xlu0 %v315, 97
      %v665 = vpop.permute.xlu0 %664
      %666 = vrot.lane.b32.xlu0 %v316, 97
      %v667 = vpop.permute.xlu0 %666
      %vm668 = vcmask 793600
      %v669 = vsel %vm668, %v645, %v647
      %v670 = vsel %vm668, %v647, %v649
      %v671 = vsel %vm668, %v651, %v653
      %v672 = vsel %vm668, %v653, %v655
      %v673 = vsel %vm668, %v657, %v659
      %v674 = vsel %vm668, %v659, %v661
      %v675 = vsel %vm668, %v663, %v665
      %v676 = vsel %vm668, %v665, %v667
      %v685 = vsel %vm350, %v669, 0.0
      %v686 = vsel %vm351, %v670, 0.0
      %v687 = vsel %vm350, %v671, 0.0
      %v688 = vsel %vm351, %v672, 0.0
      %v689 = vsel %vm350, %v673, 0.0
      %v690 = vsel %vm351, %v674, 0.0
      %v691 = vsel %vm350, %v675, 0.0
      %v692 = vsel %vm351, %v676, 0.0
      %s693 = scalar_lea.vmem %s1, 12
      %v694 = vld [vmem:[%s693] sm:$0x7]
      %v696 = vsel %vm457, %v694, 0
      %698 = vmatpush.msra.mxu0 0.0
      %699 = vmatpush.msra.mxu0 0.0
      %700 = vmatpush.msra.mxu0 0.0
      %701 = vmatpush.msra.mxu0 0.0
      %702 = vmatpush.msra.mxu0 0.0
      %703 = vmatpush.msra.mxu0 0.0
      %704 = vmatpush.msra.mxu0 0.0
      %705 = vmatpush.msra.mxu0 0.0
      %706 = vmatpush.msra.mxu0 0.0
      %707 = vmatpush.msra.mxu0 0.0
      %708 = vmatpush.msra.mxu0 0.0
      %709 = vmatpush.msra.mxu0 0.0
      %710 = vmatpush.msra.mxu0 %v691
      %711 = vmatpush.msra.mxu0 %v689
      %712 = vmatpush.msra.mxu0 %v687
      %713 = vmatpush.msra.mxu0 %v685
      %714 = vmatmul.f32.gmra.mxu0 %v696
      %v715 = vpop.f32.mrf.mxu0
      %v716 = vadd.f32 0.0, %v715
      %717 = vdwg.mxu0
      %718 = vmatpush.msra.mxu0 0.0
      %719 = vmatpush.msra.mxu0 0.0
      %720 = vmatpush.msra.mxu0 0.0
      %721 = vmatpush.msra.mxu0 0.0
      %722 = vmatpush.msra.mxu0 0.0
      %723 = vmatpush.msra.mxu0 0.0
      %724 = vmatpush.msra.mxu0 0.0
      %725 = vmatpush.msra.mxu0 0.0
      %726 = vmatpush.msra.mxu0 0.0
      %727 = vmatpush.msra.mxu0 0.0
      %728 = vmatpush.msra.mxu0 0.0
      %729 = vmatpush.msra.mxu0 0.0
      %730 = vmatpush.msra.mxu0 %v692
      %731 = vmatpush.msra.mxu0 %v690
      %732 = vmatpush.msra.mxu0 %v688
      %733 = vmatpush.msra.mxu0 %v686
      %734 = vmatmul.f32.gmra.mxu0 %v696
      %v735 = vpop.f32.mrf.mxu0
      %v736 = vadd.f32 0.0, %v735
      %737 = vdwg.mxu0
      %v738 = vadd.f32 %v642, %v716
      %v739 = vadd.f32 %v643, %v736
      %s740 = scalar_lea.vmem %s1, 16
      %v741 = vld [vmem:[%s740] sm:$0x7]
      %742 = vrot.lane.b32.xlu0 %v305, 96
      %v743 = vpop.permute.xlu0 %742
      %744 = vrot.lane.b32.xlu0 %v306, 96
      %v745 = vpop.permute.xlu0 %744
      %746 = vrot.lane.b32.xlu0 %v307, 96
      %v747 = vpop.permute.xlu0 %746
      %748 = vrot.lane.b32.xlu0 %v308, 96
      %v749 = vpop.permute.xlu0 %748
      %750 = vrot.lane.b32.xlu0 %v309, 96
      %v751 = vpop.permute.xlu0 %750
      %752 = vrot.lane.b32.xlu0 %v310, 96
      %v753 = vpop.permute.xlu0 %752
      %754 = vrot.lane.b32.xlu0 %v311, 96
      %v755 = vpop.permute.xlu0 %754
      %756 = vrot.lane.b32.xlu0 %v312, 96
      %v757 = vpop.permute.xlu0 %756
      %758 = vrot.lane.b32.xlu0 %v313, 96
      %v759 = vpop.permute.xlu0 %758
      %760 = vrot.lane.b32.xlu0 %v314, 96
      %v761 = vpop.permute.xlu0 %760
      %762 = vrot.lane.b32.xlu0 %v315, 96
      %v763 = vpop.permute.xlu0 %762
      %764 = vrot.lane.b32.xlu0 %v316, 96
      %v765 = vpop.permute.xlu0 %764
      %vm766 = vcmask 785408
      %v767 = vsel %vm766, %v743, %v745
      %v768 = vsel %vm766, %v745, %v747
      %v769 = vsel %vm766, %v749, %v751
      %v770 = vsel %vm766, %v751, %v753
      %v771 = vsel %vm766, %v755, %v757
      %v772 = vsel %vm766, %v757, %v759
      %v773 = vsel %vm766, %v761, %v763
      %v774 = vsel %vm766, %v763, %v765
      %v784 = vsel %vm457, %v741, 0
      %786 = vmatpush.msra.mxu0 0.0
      %787 = vmatpush.msra.mxu0 0.0
      %788 = vmatpush.msra.mxu0 0.0
      %789 = vmatpush.msra.mxu0 0.0
      %790 = vmatpush.msra.mxu0 0.0
      %791 = vmatpush.msra.mxu0 0.0
      %792 = vmatpush.msra.mxu0 0.0
      %793 = vmatpush.msra.mxu0 0.0
      %794 = vmatpush.msra.mxu0 0.0
      %795 = vmatpush.msra.mxu0 0.0
      %796 = vmatpush.msra.mxu0 0.0
      %797 = vmatpush.msra.mxu0 0.0
      %798 = vmatpush.msra.mxu0 %v773
      %799 = vmatpush.msra.mxu0 %v771
      %800 = vmatpush.msra.mxu0 %v769
      %801 = vmatpush.msra.mxu0 %v767
      %802 = vmatmul.f32.gmra.mxu0 %v784
      %v803 = vpop.f32.mrf.mxu0
      %v804 = vadd.f32 0.0, %v803
      %805 = vdwg.mxu0
      %806 = vmatpush.msra.mxu0 0.0
      %807 = vmatpush.msra.mxu0 0.0
      %808 = vmatpush.msra.mxu0 0.0
      %809 = vmatpush.msra.mxu0 0.0
      %810 = vmatpush.msra.mxu0 0.0
      %811 = vmatpush.msra.mxu0 0.0
      %812 = vmatpush.msra.mxu0 0.0
      %813 = vmatpush.msra.mxu0 0.0
      %814 = vmatpush.msra.mxu0 0.0
      %815 = vmatpush.msra.mxu0 0.0
      %816 = vmatpush.msra.mxu0 0.0
      %817 = vmatpush.msra.mxu0 0.0
      %818 = vmatpush.msra.mxu0 %v774
      %819 = vmatpush.msra.mxu0 %v772
      %820 = vmatpush.msra.mxu0 %v770
      %821 = vmatpush.msra.mxu0 %v768
      %822 = vmatmul.f32.gmra.mxu0 %v784
      %v823 = vpop.f32.mrf.mxu0
      %v824 = vadd.f32 0.0, %v823
      %825 = vdwg.mxu0
      %v826 = vadd.f32 %v738, %v804
      %v827 = vadd.f32 %v739, %v824
      %828 = vrot.lane.b32.xlu0 %v305, 95
      %v829 = vpop.permute.xlu0 %828
      %830 = vrot.lane.b32.xlu0 %v306, 95
      %v831 = vpop.permute.xlu0 %830
      %832 = vrot.lane.b32.xlu0 %v307, 95
      %v833 = vpop.permute.xlu0 %832
      %834 = vrot.lane.b32.xlu0 %v308, 95
      %v835 = vpop.permute.xlu0 %834
      %836 = vrot.lane.b32.xlu0 %v309, 95
      %v837 = vpop.permute.xlu0 %836
      %838 = vrot.lane.b32.xlu0 %v310, 95
      %v839 = vpop.permute.xlu0 %838
      %840 = vrot.lane.b32.xlu0 %v311, 95
      %v841 = vpop.permute.xlu0 %840
      %842 = vrot.lane.b32.xlu0 %v312, 95
      %v843 = vpop.permute.xlu0 %842
      %844 = vrot.lane.b32.xlu0 %v313, 95
      %v845 = vpop.permute.xlu0 %844
      %846 = vrot.lane.b32.xlu0 %v314, 95
      %v847 = vpop.permute.xlu0 %846
      %848 = vrot.lane.b32.xlu0 %v315, 95
      %v849 = vpop.permute.xlu0 %848
      %850 = vrot.lane.b32.xlu0 %v316, 95
      %v851 = vpop.permute.xlu0 %850
      %vm852 = vcmask 777216
      %v853 = vsel %vm852, %v829, %v831
      %v854 = vsel %vm852, %v831, %v833
      %v855 = vsel %vm852, %v835, %v837
      %v856 = vsel %vm852, %v837, %v839
      %v857 = vsel %vm852, %v841, %v843
      %v858 = vsel %vm852, %v843, %v845
      %v859 = vsel %vm852, %v847, %v849
      %v860 = vsel %vm852, %v849, %v851
      %v869 = vsel %vm546, %v853, 0.0
      %v870 = vsel %vm547, %v854, 0.0
      %v871 = vsel %vm546, %v855, 0.0
      %v872 = vsel %vm547, %v856, 0.0
      %v873 = vsel %vm546, %v857, 0.0
      %v874 = vsel %vm547, %v858, 0.0
      %v875 = vsel %vm546, %v859, 0.0
      %v876 = vsel %vm547, %v860, 0.0
      %s877 = scalar_lea.vmem %s1, 20
      %v878 = vld [vmem:[%s877] sm:$0x7]
      %v880 = vsel %vm457, %v878, 0
      %882 = vmatpush.msra.mxu0 0.0
      %883 = vmatpush.msra.mxu0 0.0
      %884 = vmatpush.msra.mxu0 0.0
      %885 = vmatpush.msra.mxu0 0.0
      %886 = vmatpush.msra.mxu0 0.0
      %887 = vmatpush.msra.mxu0 0.0
      %888 = vmatpush.msra.mxu0 0.0
      %889 = vmatpush.msra.mxu0 0.0
      %890 = vmatpush.msra.mxu0 0.0
      %891 = vmatpush.msra.mxu0 0.0
      %892 = vmatpush.msra.mxu0 0.0
      %893 = vmatpush.msra.mxu0 0.0
      %894 = vmatpush.msra.mxu0 %v875
      %895 = vmatpush.msra.mxu0 %v873
      %896 = vmatpush.msra.mxu0 %v871
      %897 = vmatpush.msra.mxu0 %v869
      %898 = vmatmul.f32.gmra.mxu0 %v880
      %v899 = vpop.f32.mrf.mxu0
      %v900 = vadd.f32 0.0, %v899
      %901 = vdwg.mxu0
      %902 = vmatpush.msra.mxu0 0.0
      %903 = vmatpush.msra.mxu0 0.0
      %904 = vmatpush.msra.mxu0 0.0
      %905 = vmatpush.msra.mxu0 0.0
      %906 = vmatpush.msra.mxu0 0.0
      %907 = vmatpush.msra.mxu0 0.0
      %908 = vmatpush.msra.mxu0 0.0
      %909 = vmatpush.msra.mxu0 0.0
      %910 = vmatpush.msra.mxu0 0.0
      %911 = vmatpush.msra.mxu0 0.0
      %912 = vmatpush.msra.mxu0 0.0
      %913 = vmatpush.msra.mxu0 0.0
      %914 = vmatpush.msra.mxu0 %v876
      %915 = vmatpush.msra.mxu0 %v874
      %916 = vmatpush.msra.mxu0 %v872
      %917 = vmatpush.msra.mxu0 %v870
      %918 = vmatmul.f32.gmra.mxu0 %v880
      %v919 = vpop.f32.mrf.mxu0
      %v920 = vadd.f32 0.0, %v919
      %921 = vdwg.mxu0
      %v922 = vadd.f32 %v826, %v900
      %v923 = vadd.f32 %v827, %v920
      %924 = vrot.lane.b32.xlu0 %v305, 81
      %v925 = vpop.permute.xlu0 %924
      %926 = vrot.lane.b32.xlu0 %v306, 81
      %v927 = vpop.permute.xlu0 %926
      %928 = vrot.lane.b32.xlu0 %v307, 81
      %v929 = vpop.permute.xlu0 %928
      %930 = vrot.lane.b32.xlu0 %v308, 81
      %v931 = vpop.permute.xlu0 %930
      %932 = vrot.lane.b32.xlu0 %v309, 81
      %v933 = vpop.permute.xlu0 %932
      %934 = vrot.lane.b32.xlu0 %v310, 81
      %v935 = vpop.permute.xlu0 %934
      %936 = vrot.lane.b32.xlu0 %v311, 81
      %v937 = vpop.permute.xlu0 %936
      %938 = vrot.lane.b32.xlu0 %v312, 81
      %v939 = vpop.permute.xlu0 %938
      %940 = vrot.lane.b32.xlu0 %v313, 81
      %v941 = vpop.permute.xlu0 %940
      %942 = vrot.lane.b32.xlu0 %v314, 81
      %v943 = vpop.permute.xlu0 %942
      %944 = vrot.lane.b32.xlu0 %v315, 81
      %v945 = vpop.permute.xlu0 %944
      %946 = vrot.lane.b32.xlu0 %v316, 81
      %v947 = vpop.permute.xlu0 %946
      %vm948 = vcmask 662528
      %v949 = vsel %vm948, %v925, %v927
      %v950 = vsel %vm948, %v927, %v929
      %v951 = vsel %vm948, %v931, %v933
      %v952 = vsel %vm948, %v933, %v935
      %v953 = vsel %vm948, %v937, %v939
      %v954 = vsel %vm948, %v939, %v941
      %v955 = vsel %vm948, %v943, %v945
      %v956 = vsel %vm948, %v945, %v947
      %v965 = vsel %vm350, %v949, 0.0
      %v966 = vsel %vm351, %v950, 0.0
      %v967 = vsel %vm350, %v951, 0.0
      %v968 = vsel %vm351, %v952, 0.0
      %v969 = vsel %vm350, %v953, 0.0
      %v970 = vsel %vm351, %v954, 0.0
      %v971 = vsel %vm350, %v955, 0.0
      %v972 = vsel %vm351, %v956, 0.0
      %s973 = scalar_lea.vmem %s1, 24
      %v974 = vld [vmem:[%s973] sm:$0x7]
      %v976 = vsel %vm457, %v974, 0
      %978 = vmatpush.msra.mxu0 0.0
      %979 = vmatpush.msra.mxu0 0.0
      %980 = vmatpush.msra.mxu0 0.0
      %981 = vmatpush.msra.mxu0 0.0
      %982 = vmatpush.msra.mxu0 0.0
      %983 = vmatpush.msra.mxu0 0.0
      %984 = vmatpush.msra.mxu0 0.0
      %985 = vmatpush.msra.mxu0 0.0
      %986 = vmatpush.msra.mxu0 0.0
      %987 = vmatpush.msra.mxu0 0.0
      %988 = vmatpush.msra.mxu0 0.0
      %989 = vmatpush.msra.mxu0 0.0
      %990 = vmatpush.msra.mxu0 %v971
      %991 = vmatpush.msra.mxu0 %v969
      %992 = vmatpush.msra.mxu0 %v967
      %993 = vmatpush.msra.mxu0 %v965
      %994 = vmatmul.f32.gmra.mxu0 %v976
      %v995 = vpop.f32.mrf.mxu0
      %v996 = vadd.f32 0.0, %v995
      %997 = vdwg.mxu0
      %998 = vmatpush.msra.mxu0 0.0
      %999 = vmatpush.msra.mxu0 0.0
      %1000 = vmatpush.msra.mxu0 0.0
      %1001 = vmatpush.msra.mxu0 0.0
      %1002 = vmatpush.msra.mxu0 0.0
      %1003 = vmatpush.msra.mxu0 0.0
      %1004 = vmatpush.msra.mxu0 0.0
      %1005 = vmatpush.msra.mxu0 0.0
      %1006 = vmatpush.msra.mxu0 0.0
      %1007 = vmatpush.msra.mxu0 0.0
      %1008 = vmatpush.msra.mxu0 0.0
      %1009 = vmatpush.msra.mxu0 0.0
      %1010 = vmatpush.msra.mxu0 %v972
      %1011 = vmatpush.msra.mxu0 %v970
      %1012 = vmatpush.msra.mxu0 %v968
      %1013 = vmatpush.msra.mxu0 %v966
      %1014 = vmatmul.f32.gmra.mxu0 %v976
      %v1015 = vpop.f32.mrf.mxu0
      %v1016 = vadd.f32 0.0, %v1015
      %1017 = vdwg.mxu0
      %v1018 = vadd.f32 %v922, %v996
      %v1019 = vadd.f32 %v923, %v1016
      %s1020 = scalar_lea.vmem %s1, 28
      %v1021 = vld [vmem:[%s1020] sm:$0x7]
      %1022 = vrot.lane.b32.xlu0 %v305, 80
      %v1023 = vpop.permute.xlu0 %1022
      %1024 = vrot.lane.b32.xlu0 %v306, 80
      %v1025 = vpop.permute.xlu0 %1024
      %1026 = vrot.lane.b32.xlu0 %v307, 80
      %v1027 = vpop.permute.xlu0 %1026
      %1028 = vrot.lane.b32.xlu0 %v308, 80
      %v1029 = vpop.permute.xlu0 %1028
      %1030 = vrot.lane.b32.xlu0 %v309, 80
      %v1031 = vpop.permute.xlu0 %1030
      %1032 = vrot.lane.b32.xlu0 %v310, 80
      %v1033 = vpop.permute.xlu0 %1032
      %1034 = vrot.lane.b32.xlu0 %v311, 80
      %v1035 = vpop.permute.xlu0 %1034
      %1036 = vrot.lane.b32.xlu0 %v312, 80
      %v1037 = vpop.permute.xlu0 %1036
      %1038 = vrot.lane.b32.xlu0 %v313, 80
      %v1039 = vpop.permute.xlu0 %1038
      %1040 = vrot.lane.b32.xlu0 %v314, 80
      %v1041 = vpop.permute.xlu0 %1040
      %1042 = vrot.lane.b32.xlu0 %v315, 80
      %v1043 = vpop.permute.xlu0 %1042
      %1044 = vrot.lane.b32.xlu0 %v316, 80
      %v1045 = vpop.permute.xlu0 %1044
      %vm1046 = vcmask 654336
      %v1047 = vsel %vm1046, %v1023, %v1025
      %v1048 = vsel %vm1046, %v1025, %v1027
      %v1049 = vsel %vm1046, %v1029, %v1031
      %v1050 = vsel %vm1046, %v1031, %v1033
      %v1051 = vsel %vm1046, %v1035, %v1037
      %v1052 = vsel %vm1046, %v1037, %v1039
      %v1053 = vsel %vm1046, %v1041, %v1043
      %v1054 = vsel %vm1046, %v1043, %v1045
      %v1064 = vsel %vm457, %v1021, 0
      %1066 = vmatpush.msra.mxu0 0.0
      %1067 = vmatpush.msra.mxu0 0.0
      %1068 = vmatpush.msra.mxu0 0.0
      %1069 = vmatpush.msra.mxu0 0.0
      %1070 = vmatpush.msra.mxu0 0.0
      %1071 = vmatpush.msra.mxu0 0.0
      %1072 = vmatpush.msra.mxu0 0.0
      %1073 = vmatpush.msra.mxu0 0.0
      %1074 = vmatpush.msra.mxu0 0.0
      %1075 = vmatpush.msra.mxu0 0.0
      %1076 = vmatpush.msra.mxu0 0.0
      %1077 = vmatpush.msra.mxu0 0.0
      %1078 = vmatpush.msra.mxu0 %v1053
      %1079 = vmatpush.msra.mxu0 %v1051
      %1080 = vmatpush.msra.mxu0 %v1049
      %1081 = vmatpush.msra.mxu0 %v1047
      %1082 = vmatmul.f32.gmra.mxu0 %v1064
      %v1083 = vpop.f32.mrf.mxu0
      %v1084 = vadd.f32 0.0, %v1083
      %1085 = vdwg.mxu0
      %1086 = vmatpush.msra.mxu0 0.0
      %1087 = vmatpush.msra.mxu0 0.0
      %1088 = vmatpush.msra.mxu0 0.0
      %1089 = vmatpush.msra.mxu0 0.0
      %1090 = vmatpush.msra.mxu0 0.0
      %1091 = vmatpush.msra.mxu0 0.0
      %1092 = vmatpush.msra.mxu0 0.0
      %1093 = vmatpush.msra.mxu0 0.0
      %1094 = vmatpush.msra.mxu0 0.0
      %1095 = vmatpush.msra.mxu0 0.0
      %1096 = vmatpush.msra.mxu0 0.0
      %1097 = vmatpush.msra.mxu0 0.0
      %1098 = vmatpush.msra.mxu0 %v1054
      %1099 = vmatpush.msra.mxu0 %v1052
      %1100 = vmatpush.msra.mxu0 %v1050
      %1101 = vmatpush.msra.mxu0 %v1048
      %1102 = vmatmul.f32.gmra.mxu0 %v1064
      %v1103 = vpop.f32.mrf.mxu0
      %v1104 = vadd.f32 0.0, %v1103
      %1105 = vdwg.mxu0
      %v1106 = vadd.f32 %v1018, %v1084
      %v1107 = vadd.f32 %v1019, %v1104
      %1108 = vrot.lane.b32.xlu0 %v305, 79
      %v1109 = vpop.permute.xlu0 %1108
      %1110 = vrot.lane.b32.xlu0 %v306, 79
      %v1111 = vpop.permute.xlu0 %1110
      %1112 = vrot.lane.b32.xlu0 %v307, 79
      %v1113 = vpop.permute.xlu0 %1112
      %1114 = vrot.lane.b32.xlu0 %v308, 79
      %v1115 = vpop.permute.xlu0 %1114
      %1116 = vrot.lane.b32.xlu0 %v309, 79
      %v1117 = vpop.permute.xlu0 %1116
      %1118 = vrot.lane.b32.xlu0 %v310, 79
      %v1119 = vpop.permute.xlu0 %1118
      %1120 = vrot.lane.b32.xlu0 %v311, 79
      %v1121 = vpop.permute.xlu0 %1120
      %1122 = vrot.lane.b32.xlu0 %v312, 79
      %v1123 = vpop.permute.xlu0 %1122
      %1124 = vrot.lane.b32.xlu0 %v313, 79
      %v1125 = vpop.permute.xlu0 %1124
      %1126 = vrot.lane.b32.xlu0 %v314, 79
      %v1127 = vpop.permute.xlu0 %1126
      %1128 = vrot.lane.b32.xlu0 %v315, 79
      %v1129 = vpop.permute.xlu0 %1128
      %1130 = vrot.lane.b32.xlu0 %v316, 79
      %v1131 = vpop.permute.xlu0 %1130
      %vm1132 = vcmask 646144
      %v1133 = vsel %vm1132, %v1109, %v1111
      %v1134 = vsel %vm1132, %v1111, %v1113
      %v1135 = vsel %vm1132, %v1115, %v1117
      %v1136 = vsel %vm1132, %v1117, %v1119
      %v1137 = vsel %vm1132, %v1121, %v1123
      %v1138 = vsel %vm1132, %v1123, %v1125
      %v1139 = vsel %vm1132, %v1127, %v1129
      %v1140 = vsel %vm1132, %v1129, %v1131
      %v1149 = vsel %vm546, %v1133, 0.0
      %v1150 = vsel %vm547, %v1134, 0.0
      %v1151 = vsel %vm546, %v1135, 0.0
      %v1152 = vsel %vm547, %v1136, 0.0
      %v1153 = vsel %vm546, %v1137, 0.0
      %v1154 = vsel %vm547, %v1138, 0.0
      %v1155 = vsel %vm546, %v1139, 0.0
      %v1156 = vsel %vm547, %v1140, 0.0
      %s1157 = scalar_lea.vmem %s1, 32
      %v1158 = vld [vmem:[%s1157] sm:$0x7]
      %v1160 = vsel %vm457, %v1158, 0
      %1162 = vmatpush.msra.mxu0 0.0
      %1163 = vmatpush.msra.mxu0 0.0
      %1164 = vmatpush.msra.mxu0 0.0
      %1165 = vmatpush.msra.mxu0 0.0
      %1166 = vmatpush.msra.mxu0 0.0
      %1167 = vmatpush.msra.mxu0 0.0
      %1168 = vmatpush.msra.mxu0 0.0
      %1169 = vmatpush.msra.mxu0 0.0
      %1170 = vmatpush.msra.mxu0 0.0
      %1171 = vmatpush.msra.mxu0 0.0
      %1172 = vmatpush.msra.mxu0 0.0
      %1173 = vmatpush.msra.mxu0 0.0
      %1174 = vmatpush.msra.mxu0 %v1155
      %1175 = vmatpush.msra.mxu0 %v1153
      %1176 = vmatpush.msra.mxu0 %v1151
      %1177 = vmatpush.msra.mxu0 %v1149
      %1178 = vmatmul.f32.gmra.mxu0 %v1160
      %v1179 = vpop.f32.mrf.mxu0
      %v1180 = vadd.f32 0.0, %v1179
      %1181 = vdwg.mxu0
      %1182 = vmatpush.msra.mxu0 0.0
      %1183 = vmatpush.msra.mxu0 0.0
      %1184 = vmatpush.msra.mxu0 0.0
      %1185 = vmatpush.msra.mxu0 0.0
      %1186 = vmatpush.msra.mxu0 0.0
      %1187 = vmatpush.msra.mxu0 0.0
      %1188 = vmatpush.msra.mxu0 0.0
      %1189 = vmatpush.msra.mxu0 0.0
      %1190 = vmatpush.msra.mxu0 0.0
      %1191 = vmatpush.msra.mxu0 0.0
      %1192 = vmatpush.msra.mxu0 0.0
      %1193 = vmatpush.msra.mxu0 0.0
      %1194 = vmatpush.msra.mxu0 %v1156
      %1195 = vmatpush.msra.mxu0 %v1154
      %1196 = vmatpush.msra.mxu0 %v1152
      %1197 = vmatpush.msra.mxu0 %v1150
      %1198 = vmatmul.f32.gmra.mxu0 %v1160
      %v1199 = vpop.f32.mrf.mxu0
      %v1200 = vadd.f32 0.0, %v1199
      %1201 = vdwg.mxu0
      %v1202 = vadd.f32 %v1106, %v1180
      %v1203 = vadd.f32 %v1107, %v1200
      %v1204 = vld [vmem:[%s2] sm:$0x7]
      %1206 = vset.pattern.permute.xlu0 0
      %1207 = vperm.xlu0 %1206, %v1204
      %v1208 = vpop.permute.xlu0 %1207
      %v1210 = vadd.f32 %v1202, %v1208
      %v1211 = vadd.f32 %v1203, %v1208
      %v1212 = vxor.u32 %v1210, 2147483648
      %v1213 = vxor.u32 %v1211, 2147483648
      %v1214 = vmul.f32 %v1212, 1.442695
      %v1215 = vpow.pop %v1214
      %v1216 = vmul.f32 %v1213, 1.442695
      %v1217 = vpow.pop %v1216
      %v1218 = vadd.f32 %v1215, 1.0
      %v1219 = vadd.f32 %v1217, 1.0
      %v1220 = vrcp.pop %v1218
      %v1221 = vmul.f32 %v1218, %v1220
      %v1222 = vsub.f32 1.0, %v1221
      %v1223 = vmul.f32 %v1220, %v1222
      %v1224 = vadd.f32 %v1220, %v1223
      %vm1225 = vweird.f32 %v1218
      %vm1226 = vweird.f32 %v1220
      %vm1227 = vmor %vm1225, %vm1226
      %v1228 = vsel %vm1227, %v1220, %v1224
      %v1229 = vand.u32 2147483647, %v1218
      %vm1230 = vcmp.eq.f32.partialorder %v1229, 8.507059e+37
      %v1231 = vand.u32 %v1218, 2147483648
      %v1232 = vor.u32 1.1754944e-38, %v1231
      %v1233 = vsel %vm1230, %v1232, %v1228
      %v1234 = vmul.f32 1.0, %v1233
      %v1235 = vrcp.pop %v1219
      %v1236 = vmul.f32 %v1219, %v1235
      %v1237 = vsub.f32 1.0, %v1236
      %v1238 = vmul.f32 %v1235, %v1237
      %v1239 = vadd.f32 %v1235, %v1238
      %vm1240 = vweird.f32 %v1219
      %vm1241 = vweird.f32 %v1235
      %vm1242 = vmor %vm1240, %vm1241
      %v1243 = vsel %vm1242, %v1235, %v1239
      %v1244 = vand.u32 2147483647, %v1219
      %vm1245 = vcmp.eq.f32.partialorder %v1244, 8.507059e+37
      %v1246 = vand.u32 %v1219, 2147483648
      %v1247 = vor.u32 1.1754944e-38, %v1246
      %v1248 = vsel %vm1245, %v1247, %v1243
      %v1249 = vmul.f32 1.0, %v1248
      %v1252 = vrot.slane %v1249, 4
      %vm1253 = vcmask 1043456
      %v1254 = vsel %vm1253, %v1234, %v1252
      %1256 = vst [vmem:[%s304] sm:$0x77] %v1254
      %v1257 = vld [vmem:[%s289] sm:$0x77]
      %1259 = vst [vmem:[#allocation1] ss:$2 sm:$0xff] %v1257
      %v1260 = vld.sshfl [vmem:[#allocation1] sm:$0xff pattern:$0x75316420]
      %v1261 = vld.sshfl [vmem:[#allocation1 + $0x8] sm:$0xff pattern:$0x75316420]
      %v1264 = vmul.f32 %v1234, %v1260
      %v1265 = vmul.f32 %v1249, %v1261
      %v1266 = vld [vmem:[%s294] sm:$0x77]
      %1268 = vst [vmem:[#allocation1] ss:$2 sm:$0xff] %v1266
      %v1269 = vld.sshfl [vmem:[#allocation1] sm:$0xff pattern:$0x75316420]
      %v1270 = vld.sshfl [vmem:[#allocation1 + $0x8] sm:$0xff pattern:$0x75316420]
      %v1273 = vadd.f32 %v1264, %v1269
      %v1274 = vadd.f32 %v1265, %v1270
      %v1277 = vrot.slane %v1274, 4
      %v1278 = vsel %vm1253, %v1273, %v1277
      %1280 = vst [vmem:[%s299] sm:$0x77] %v1278
      %p1281 = scmp.lt.s32.totalorder %s18, 1
      %s1282 = scalar_select %p1281, %s18, 1
      %s1283 = smul.addr %s1282, 2
      %s1284 = smul.addr %s1283, 4
      %s1285 = scalar_lea.vmem %s5, %s1284
      %p1286 = scmp.lt.s32.totalorder %s18, 1
      %s1287 = scalar_select %p1286, %s18, 1
      %s1288 = smul.addr %s1287, 2
      %s1289 = smul.addr %s1288, 4
      %s1290 = scalar_lea.vmem %s6, %s1289
      // Predicated region
      $region41: #{cheby_sum_block_3dab.3} parent=39 // pred_check
        %p1291 = pneg %p156
      $region42: #{cheby_sum_block_3dab.3} parent=39 // pred_check_branch
        %1293 = sbr.rel (%p1291) target = $region44
      $region43: #{cheby_sum_block_3dab.3} parent=39 // pred_region
        _
      $region44: #{cheby_sum_block_3dab.3} parent=39 // pred_fallthru
        _
      // Predicated region
      $region45: #{cheby_sum_block_3dab.3} parent=39 // pred_check
        %p1294 = pneg %p182
      $region46: #{cheby_sum_block_3dab.3} parent=39 // pred_check_branch
        %1296 = sbr.rel (%p1294) target = $region48
      $region47: #{cheby_sum_block_3dab.3} parent=39 // pred_region
        _
      $region48: #{cheby_sum_block_3dab.3} parent=39 // pred_fallthru
        _
    $region40: #{cheby_sum_block_3dab.3} parent=5 // pred_fallthru
      _
    %p1297 = scmp.le.s32.totalorder 2, %s13
    // Predicated region
    $region49: #{cheby_sum_block_3dab.3} parent=5 // pred_check
      %p1298 = pneg %p1297
    $region50: #{cheby_sum_block_3dab.3} parent=5 // pred_check_branch
      %1300 = sbr.rel (%p1298) target = $region52
    $region51: #{cheby_sum_block_3dab.3} parent=5 // pred_region
      %s1301 = ssub.s32 %s13, 2
      // Predicated region
      $region53: #{cheby_sum_block_3dab.3} parent=51 // pred_check
        %p1302 = pneg %p162
      $region54: #{cheby_sum_block_3dab.3} parent=51 // pred_check_branch
        %1304 = sbr.rel (%p1302) target = $region56
      $region55: #{cheby_sum_block_3dab.3} parent=51 // pred_region
        %p1305 = scmp.lt.s32.totalorder %s19, 1
        %s1306 = scalar_select %p1305, %s19, 1
        %s1307 = smul.addr %s1306, 2
        %s1308 = smul.addr %s1307, 4
        %s1309 = scalar_lea.vmem %s5, %s1308
      $region56: #{cheby_sum_block_3dab.3} parent=51 // pred_fallthru
        _
      // Predicated region
      $region57: #{cheby_sum_block_3dab.3} parent=51 // pred_check
        %p1310 = pneg %p188
      $region58: #{cheby_sum_block_3dab.3} parent=51 // pred_check_branch
        %1312 = sbr.rel (%p1310) target = $region60
      $region59: #{cheby_sum_block_3dab.3} parent=51 // pred_region
        %p1313 = scmp.lt.s32.totalorder %s19, 1
        %s1314 = scalar_select %p1313, %s19, 1
        %s1315 = smul.addr %s1314, 2
        %s1316 = smul.addr %s1315, 4
        %s1317 = scalar_lea.vmem %s6, %s1316
      $region60: #{cheby_sum_block_3dab.3} parent=51 // pred_fallthru
        _
    $region52: #{cheby_sum_block_3dab.3} parent=5 // pred_fallthru
      _
  $region6: #{cheby_sum_block_3dab.3} parent=0 // loop_footer
    %s17 = sadd.s32 1, %s13
  $region7: #{cheby_sum_block_3dab.3} parent=0 // loop_footer_branch
    %12 = sbr.rel target = $region3
  $region8: #{cheby_sum_block_3dab.3} parent=0 // loop_exit
    _

// kernel: cheby_sum_block_3dab.2
$region0: #{cheby_sum_block_3dab.2}
  #allocation0 [shape = 'u32[]', space=smem, size = 0x4, offset = 0x4, fixed_abs, tag = 'smem constant byte address 0x4 - core index']
  #allocation1 [shape = 'u32[72,128]{1,0:T(1,128)}', space=vmem, size = 0x9000, scoped, tag = 'internal scratch']
  %s0 = inlined_call_operand.vmem [shape: f32[2,9,320], index: 0, kind: input, shape index: {}]
  %s1 = inlined_call_operand.vmem [shape: f32[9,32,9], index: 1, kind: input, shape index: {}]
  %s2 = inlined_call_operand.vmem [shape: f32[32,1], index: 2, kind: input, shape index: {}]
  %s3 = inlined_call_operand.vmem [shape: f32[2,32,320], index: 3, kind: output, shape index: {}]
  %s4 = sld [smem:[#allocation0]]
  $region45: #{cheby_sum_block_3dab.2} parent=0
    _
  %s6 = ssub.s32 1, %s4
  %s7 = scalar_select 0, %s6, %s4
  loop: start=0, step=1, limit=4
  $region2: #{cheby_sum_block_3dab.2} parent=0 // loop_pre_header
    _
  $region3: #{cheby_sum_block_3dab.2} parent=0 // loop_header
    %s9 = sphi 0, %s13
    %p10 = scmp.ge.s32.totalorder %s9, 4
    %s19 = sphi 0, %s21
    %s22 = sphi 0, %s19
    %s23 = sphi 0, %s22
    %s39 = sphi 0, %s23
    %s43 = sphi 0, %s43
    %s45 = sphi 0, %s43
    %s46 = sphi 0, %s45
    %s60 = sphi 0, %s46
    %s64 = sphi 0, %s64
    %s66 = sphi 0, %s64
    %s67 = sphi 0, %s66
    %s81 = sphi 0, %s67
    %s87 = sphi 0, %s89
    %s90 = sphi 0, %s87
    %s91 = sphi 0, %s90
    %s107 = sphi 0, %s91
  $region4: #{cheby_sum_block_3dab.2} parent=0 // loop_header_branch
    %12 = sbr.rel (%p10) target = $region8
  $region5: #{cheby_sum_block_3dab.2} parent=0 // loop_body
    %s14 = ssub.s32 %s9, 1
    %s15 = ssub.s32 %s9, 2
    %s16 = sadd.s32 %s9, 1
    %s17 = ssub.s32 %s9, %s16
    %p18 = scmp.eq.s32.totalorder %s17, 0
    %s20 = sadd.s32 %s19, 1
    %s21 = scalar_select %p18, %s19, %s20
    %p24 = pneg %p18
    %p25 = scmp.eq.s32.totalorder %s9, 1
    %p26 = por %p24, %p25
    %p27 = scmp.ne.s32.totalorder %s19, %s22
    %p28 = scmp.eq.s32.totalorder %s9, 0
    %p29 = por %p27, %p28
    %p30 = scmp.ne.s32.totalorder %s19, %s22
    %p31 = scmp.eq.s32.totalorder %s14, 1
    %p32 = por %p30, %p31
    %p33 = scmp.ne.s32.totalorder %s22, %s23
    %p34 = scmp.eq.s32.totalorder %s14, 0
    %p35 = por %p33, %p34
    %p36 = scmp.ne.s32.totalorder %s22, %s23
    %p37 = scmp.eq.s32.totalorder %s15, 1
    %p38 = por %p36, %p37
    %p40 = scmp.ne.s32.totalorder %s23, %s39
    %p41 = scmp.eq.s32.totalorder %s15, 0
    %p42 = por %p40, %p41
    %s44 = sadd.s32 %s43, 1
    %p47 = scmp.eq.s32.totalorder %s9, 1
    %p48 = scmp.ne.s32.totalorder %s43, %s45
    %p49 = scmp.eq.s32.totalorder %s9, 0
    %p50 = por %p48, %p49
    %p51 = scmp.ne.s32.totalorder %s43, %s45
    %p52 = scmp.eq.s32.totalorder %s14, 1
    %p53 = por %p51, %p52
    %p54 = scmp.ne.s32.totalorder %s45, %s46
    %p55 = scmp.eq.s32.totalorder %s14, 0
    %p56 = por %p54, %p55
    %p57 = scmp.ne.s32.totalorder %s45, %s46
    %p58 = scmp.eq.s32.totalorder %s15, 1
    %p59 = por %p57, %p58
    %p61 = scmp.ne.s32.totalorder %s46, %s60
    %p62 = scmp.eq.s32.totalorder %s15, 0
    %p63 = por %p61, %p62
    %s65 = sadd.s32 %s64, 1
    %p68 = scmp.eq.s32.totalorder %s9, 1
    %p69 = scmp.ne.s32.totalorder %s64, %s66
    %p70 = scmp.eq.s32.totalorder %s9, 0
    %p71 = por %p69, %p70
    %p72 = scmp.ne.s32.totalorder %s64, %s66
    %p73 = scmp.eq.s32.totalorder %s14, 1
    %p74 = por %p72, %p73
    %p75 = scmp.ne.s32.totalorder %s66, %s67
    %p76 = scmp.eq.s32.totalorder %s14, 0
    %p77 = por %p75, %p76
    %p78 = scmp.ne.s32.totalorder %s66, %s67
    %p79 = scmp.eq.s32.totalorder %s15, 1
    %p80 = por %p78, %p79
    %p82 = scmp.ne.s32.totalorder %s67, %s81
    %p83 = scmp.eq.s32.totalorder %s15, 0
    %p84 = por %p82, %p83
    %s85 = ssub.s32 %s9, %s16
    %p86 = scmp.eq.s32.totalorder %s85, 0
    %s88 = sadd.s32 %s87, 1
    %s89 = scalar_select %p86, %s87, %s88
    %p92 = pneg %p86
    %p93 = scmp.eq.s32.totalorder %s9, 1
    %p94 = por %p92, %p93
    %p95 = scmp.ne.s32.totalorder %s87, %s90
    %p96 = scmp.eq.s32.totalorder %s9, 0
    %p97 = por %p95, %p96
    %p98 = scmp.ne.s32.totalorder %s87, %s90
    %p99 = scmp.eq.s32.totalorder %s14, 1
    %p100 = por %p98, %p99
    %p101 = scmp.ne.s32.totalorder %s90, %s91
    %p102 = scmp.eq.s32.totalorder %s14, 0
    %p103 = por %p101, %p102
    %p104 = scmp.ne.s32.totalorder %s90, %s91
    %p105 = scmp.eq.s32.totalorder %s15, 1
    %p106 = por %p104, %p105
    %p108 = scmp.ne.s32.totalorder %s91, %s107
    %p109 = scmp.eq.s32.totalorder %s15, 0
    %p110 = por %p108, %p109
    %p111 = scmp.le.s32.totalorder 1, %s9
    %p112 = scmp.lt.s32.totalorder %s9, 3
    %p113 = pnand %p111, %p112
    %p114 = pneg %p113
    // Predicated region
    $region9: #{cheby_sum_block_3dab.2} parent=5 // pred_check
      _
    $region10: #{cheby_sum_block_3dab.2} parent=5 // pred_check_branch
      %116 = sbr.rel (%p113) target = $region12
    $region11: #{cheby_sum_block_3dab.2} parent=5 // pred_region
      %s117 = ssub.s32 %s9, 1
      // Predicated region
      $region13: #{cheby_sum_block_3dab.2} parent=11 // pred_check
        %p118 = pneg %p56
      $region14: #{cheby_sum_block_3dab.2} parent=11 // pred_check_branch
        %120 = sbr.rel (%p118) target = $region16
      $region15: #{cheby_sum_block_3dab.2} parent=11 // pred_region
        _
      $region16: #{cheby_sum_block_3dab.2} parent=11 // pred_fallthru
        _
      // Predicated region
      $region17: #{cheby_sum_block_3dab.2} parent=11 // pred_check
        %p121 = pneg %p77
      $region18: #{cheby_sum_block_3dab.2} parent=11 // pred_check_branch
        %123 = sbr.rel (%p121) target = $region20
      $region19: #{cheby_sum_block_3dab.2} parent=11 // pred_region
        _
      $region20: #{cheby_sum_block_3dab.2} parent=11 // pred_fallthru
        _
    $region12: #{cheby_sum_block_3dab.2} parent=5 // pred_fallthru
      _
    %p124 = scmp.lt.s32.totalorder %s9, 2
    // Predicated region
    $region21: #{cheby_sum_block_3dab.2} parent=5 // pred_check
      %p125 = pneg %p124
    $region22: #{cheby_sum_block_3dab.2} parent=5 // pred_check_branch
      %127 = sbr.rel (%p125) target = $region24
    $region23: #{cheby_sum_block_3dab.2} parent=5 // pred_region
      // Predicated region
      $region25: #{cheby_sum_block_3dab.2} parent=23 // pred_check
        %p128 = pneg %p29
      $region26: #{cheby_sum_block_3dab.2} parent=23 // pred_check_branch
        %130 = sbr.rel (%p128) target = $region28
      $region27: #{cheby_sum_block_3dab.2} parent=23 // pred_region
        %p131 = scmp.lt.s32.totalorder %s9, 1
        %s132 = scalar_select %p131, %s9, 1
        %s133 = smul.addr %s132, 6
        %s134 = smul.addr %s133, 8
        %s135 = scalar_lea.vmem %s0, %s134
      $region28: #{cheby_sum_block_3dab.2} parent=23 // pred_fallthru
        _
    $region24: #{cheby_sum_block_3dab.2} parent=5 // pred_fallthru
      _
    %p136 = scmp.le.s32.totalorder 1, %s9
    %p137 = scmp.lt.s32.totalorder %s9, 3
    %p138 = pnand %p136, %p137
    %p139 = pneg %p138
    // Predicated region
    $region29: #{cheby_sum_block_3dab.2} parent=5 // pred_check
      _
    $region30: #{cheby_sum_block_3dab.2} parent=5 // pred_check_branch
      %141 = sbr.rel (%p138) target = $region32
    $region31: #{cheby_sum_block_3dab.2} parent=5 // pred_region
      %s142 = ssub.s32 %s9, 1
      %p143 = scmp.lt.s32.totalorder %s14, 1
      %s144 = scalar_select %p143, %s14, 1
      %s145 = smul.addr %s144, 6
      %s146 = smul.addr %s145, 8
      %s147 = scalar_lea.vmem %s0, %s146
      %p148 = pneg %p35
      %p149 = pneg %p32
      %p150 = pneg %p56
      %p151 = pneg %p53
      %p152 = pneg %p77
      %p153 = pneg %p74
      %p154 = pneg %p103
      %p155 = pneg %p100
      %p156 = scmp.lt.s32.totalorder %s14, 1
      %s157 = scalar_select %p156, %s14, 1
      %s158 = smul.addr %s157, 12
      %s159 = smul.addr %s158, 8
      %s160 = scalar_lea.vmem %s3, %s159
      %p161 = scmp.lt.s32.totalorder %s14, 1
      %s162 = scalar_select %p161, %s14, 1
      %s163 = smul.addr %s162, 6
      %s164 = smul.addr %s163, 8
      %s165 = scalar_lea.vmem %s0, %s164
      %p166 = scmp.lt.s32.totalorder %s14, 1
      %s167 = scalar_select %p166, %s14, 1
      %s168 = smul.addr %s167, 12
      %s169 = smul.addr %s168, 8
      %s170 = scalar_lea.vmem %s3, %s169
      %v171 = vld [vmem:[%s165] sm:$0xff]
      %v172 = vld [vmem:[%s165 + $0x8] sm:$0xff]
      %v173 = vld [vmem:[%s165 + $0x10] sm:$0xff]
      %v174 = vld [vmem:[%s165 + $0x18] sm:$0x1]
      %v175 = vld [vmem:[%s165 + $0x20] sm:$0x1]
      %v176 = vld [vmem:[%s165 + $0x28] sm:$0x1]
      %v177 = vlaneseq
      %v178 = vand.u32 %v177, 127
      %v179 = vadd.s32 %v178, 128
      %vm180 = vcmp.lt.s32.totalorder %v178, 0
      %v181 = vsub.s32 0, %v178
      %v182 = vsel %vm180, %v181, %v178
      %v183 = vshrl.u32 %v182, 4
      %v184 = vand.u32 %v182, 15
      %v185 = vsub.s32 0, %v184
      %v186 = vsel %vm180, %v185, %v184
      %vm187 = vcmp.lt.s32.totalorder %v179, 0
      %v188 = vsub.s32 0, %v179
      %v189 = vsel %vm187, %v188, %v179
      %v190 = vshrl.u32 %v189, 4
      %v191 = vand.u32 %v189, 15
      %v192 = vsub.s32 0, %v191
      %v193 = vsel %vm187, %v192, %v191
      %vm194 = vcmp.ne.s32.totalorder %v186, 0
      %vm195 = vcmp.ne.s32.totalorder %v193, 0
      %vm196 = vcmp.lt.s32.totalorder %v186, 0
      %vm197 = vcmp.lt.s32.totalorder %v193, 0
      %vm198 = vmand %vm196, %vm194
      %vm199 = vmand %vm197, %vm195
      %v200 = vadd.s32 %v186, 16
      %v201 = vadd.s32 %v193, 16
      %v202 = vsel %vm198, %v200, %v186
      %v203 = vsel %vm199, %v201, %v193
      %vm204 = vcmp.ne.s32.totalorder %v202, 0
      %vm205 = vcmp.ne.s32.totalorder %v203, 0
      %vm206 = vcmp.ne.s32.totalorder %v202, 15
      %vm207 = vcmp.ne.s32.totalorder %v203, 15
      %v208 = vsel %vm204, 1, 0
      %v209 = vsel %vm205, 1, 0
      %vm210 = vcmp.eq.s32.totalorder %v208, 1
      %vm211 = vcmp.eq.s32.totalorder %v209, 1
      %218 = vrot.lane.b32.xlu0 %v171, 113
      %v219 = vpop.permute.xlu0 %218
      %220 = vrot.lane.b32.xlu0 %v172, 113
      %v221 = vpop.permute.xlu0 %220
      %222 = vrot.lane.b32.xlu0 %v173, 113
      %v223 = vpop.permute.xlu0 %222
      %224 = vrot.lane.b32.xlu0 %v174, 113
      %v225 = vpop.permute.xlu0 %224
      %226 = vrot.lane.b32.xlu0 %v175, 113
      %v227 = vpop.permute.xlu0 %226
      %228 = vrot.lane.b32.xlu0 %v176, 113
      %v229 = vpop.permute.xlu0 %228
      %vm230 = vcmask 924672
      %v231 = vsel %vm230, %v219, %v221
      %v232 = vsel %vm230, %v221, %v223
      %v233 = vsel %vm230, %v225, %v227
      %v234 = vsel %vm230, %v227, %v229
      %v239 = vsel %vm210, %v231, 0.0
      %v240 = vsel %vm211, %v232, 0.0
      %v241 = vsel %vm210, %v233, 0.0
      %v242 = vsel %vm211, %v234, 0.0
      %v243 = vld [vmem:[%s1] sm:$0xff]
      %v244 = vld [vmem:[%s1 + $0x8] sm:$0xff]
      %v245 = vld [vmem:[%s1 + $0x10] sm:$0xff]
      %v246 = vld [vmem:[%s1 + $0x18] sm:$0xff]
      %s247 = scalar_lea.vmem %s1, 32
      %v248 = vld [vmem:[%s247] sm:$0xff]
      %v249 = vld [vmem:[%s247 + $0x8] sm:$0xff]
      %v250 = vld [vmem:[%s247 + $0x10] sm:$0xff]
      %v251 = vld [vmem:[%s247 + $0x18] sm:$0xff]
      %252 = vrot.lane.b32.xlu0 %v171, 112
      %v253 = vpop.permute.xlu0 %252
      %254 = vrot.lane.b32.xlu0 %v172, 112
      %v255 = vpop.permute.xlu0 %254
      %256 = vrot.lane.b32.xlu0 %v173, 112
      %v257 = vpop.permute.xlu0 %256
      %258 = vrot.lane.b32.xlu0 %v174, 112
      %v259 = vpop.permute.xlu0 %258
      %260 = vrot.lane.b32.xlu0 %v175, 112
      %v261 = vpop.permute.xlu0 %260
      %262 = vrot.lane.b32.xlu0 %v176, 112
      %v263 = vpop.permute.xlu0 %262
      %vm264 = vcmask 916480
      %v265 = vsel %vm264, %v253, %v255
      %v266 = vsel %vm264, %v255, %v257
      %v267 = vsel %vm264, %v259, %v261
      %v268 = vsel %vm264, %v261, %v263
      %vm271 = vcmask 72704
      %v273 = vsel %vm271, %v248, 0
      %v276 = vsel %vm271, %v249, 0
      %v279 = vsel %vm271, %v250, 0
      %v282 = vsel %vm271, %v251, 0
      %vm284 = vcmask 1040384
      %v285 = vsel %vm284, %v267, 0
      %v287 = vsel %vm284, %v268, 0
      %289 = vmatpush.msra.mxu0 0.0
      %290 = vmatpush.msra.mxu0 0.0
      %291 = vmatpush.msra.mxu0 0.0
      %292 = vmatpush.msra.mxu0 0.0
      %293 = vmatpush.msra.mxu0 0.0
      %294 = vmatpush.msra.mxu0 0.0
      %295 = vmatpush.msra.mxu0 0.0
      %296 = vmatpush.msra.mxu0 0.0
      %297 = vmatpush.msra.mxu0 0.0
      %298 = vmatpush.msra.mxu0 0.0
      %299 = vmatpush.msra.mxu0 0.0
      %300 = vmatpush.msra.mxu0 0.0
      %301 = vmatpush.msra.mxu0 0.0
      %302 = vmatpush.msra.mxu0 0.0
      %303 = vmatpush.msra.mxu0 %v285
      %304 = vmatpush.msra.mxu0 %v265
      %305 = vmatmul.f32.gmra.mxu0 %v273
      %v306 = vpop.f32.mrf.mxu0
      %v307 = vadd.f32 0.0, %v306
      %308 = vmatmul.f32.gmra.mxu0 %v276
      %v309 = vpop.f32.mrf.mxu0
      %v310 = vadd.f32 0.0, %v309
      %311 = vmatmul.f32.gmra.mxu0 %v279
      %v312 = vpop.f32.mrf.mxu0
      %v313 = vadd.f32 0.0, %v312
      %314 = vmatmul.f32.gmra.mxu0 %v282
      %v315 = vpop.f32.mrf.mxu0
      %v316 = vadd.f32 0.0, %v315
      %317 = vdwg.mxu0
      %318 = vmatpush.msra.mxu0 0.0
      %319 = vmatpush.msra.mxu0 0.0
      %320 = vmatpush.msra.mxu0 0.0
      %321 = vmatpush.msra.mxu0 0.0
      %322 = vmatpush.msra.mxu0 0.0
      %323 = vmatpush.msra.mxu0 0.0
      %324 = vmatpush.msra.mxu0 0.0
      %325 = vmatpush.msra.mxu0 0.0
      %326 = vmatpush.msra.mxu0 0.0
      %327 = vmatpush.msra.mxu0 0.0
      %328 = vmatpush.msra.mxu0 0.0
      %329 = vmatpush.msra.mxu0 0.0
      %330 = vmatpush.msra.mxu0 0.0
      %331 = vmatpush.msra.mxu0 0.0
      %332 = vmatpush.msra.mxu0 %v287
      %333 = vmatpush.msra.mxu0 %v266
      %334 = vmatmul.f32.gmra.mxu0 %v273
      %v335 = vpop.f32.mrf.mxu0
      %v336 = vadd.f32 0.0, %v335
      %337 = vmatmul.f32.gmra.mxu0 %v276
      %v338 = vpop.f32.mrf.mxu0
      %v339 = vadd.f32 0.0, %v338
      %340 = vmatmul.f32.gmra.mxu0 %v279
      %v341 = vpop.f32.mrf.mxu0
      %v342 = vadd.f32 0.0, %v341
      %343 = vmatmul.f32.gmra.mxu0 %v282
      %v344 = vpop.f32.mrf.mxu0
      %v345 = vadd.f32 0.0, %v344
      %346 = vdwg.mxu0
      %v348 = vsel %vm271, %v243, 0
      %v351 = vsel %vm271, %v244, 0
      %v354 = vsel %vm271, %v245, 0
      %v357 = vsel %vm271, %v246, 0
      %v360 = vsel %vm284, %v241, 0
      %v363 = vsel %vm284, %v242, 0
      %365 = vmatpush.msra.mxu0 0.0
      %366 = vmatpush.msra.mxu0 0.0
      %367 = vmatpush.msra.mxu0 0.0
      %368 = vmatpush.msra.mxu0 0.0
      %369 = vmatpush.msra.mxu0 0.0
      %370 = vmatpush.msra.mxu0 0.0
      %371 = vmatpush.msra.mxu0 0.0
      %372 = vmatpush.msra.mxu0 0.0
      %373 = vmatpush.msra.mxu0 0.0
      %374 = vmatpush.msra.mxu0 0.0
      %375 = vmatpush.msra.mxu0 0.0
      %376 = vmatpush.msra.mxu0 0.0
      %377 = vmatpush.msra.mxu0 0.0
      %378 = vmatpush.msra.mxu0 0.0
      %379 = vmatpush.msra.mxu0 %v360
      %380 = vmatpush.msra.mxu0 %v239
      %381 = vmatmul.f32.gmra.mxu0 %v348
      %v382 = vpop.f32.mrf.mxu0
      %v383 = vadd.f32 %v307, %v382
      %384 = vmatmul.f32.gmra.mxu0 %v351
      %v385 = vpop.f32.mrf.mxu0
      %v386 = vadd.f32 %v310, %v385
      %387 = vmatmul.f32.gmra.mxu0 %v354
      %v388 = vpop.f32.mrf.mxu0
      %v389 = vadd.f32 %v313, %v388
      %390 = vmatmul.f32.gmra.mxu0 %v357
      %v391 = vpop.f32.mrf.mxu0
      %v392 = vadd.f32 %v316, %v391
      %393 = vdwg.mxu0
      %394 = vmatpush.msra.mxu0 0.0
      %395 = vmatpush.msra.mxu0 0.0
      %396 = vmatpush.msra.mxu0 0.0
      %397 = vmatpush.msra.mxu0 0.0
      %398 = vmatpush.msra.mxu0 0.0
      %399 = vmatpush.msra.mxu0 0.0
      %400 = vmatpush.msra.mxu0 0.0
      %401 = vmatpush.msra.mxu0 0.0
      %402 = vmatpush.msra.mxu0 0.0
      %403 = vmatpush.msra.mxu0 0.0
      %404 = vmatpush.msra.mxu0 0.0
      %405 = vmatpush.msra.mxu0 0.0
      %406 = vmatpush.msra.mxu0 0.0
      %407 = vmatpush.msra.mxu0 0.0
      %408 = vmatpush.msra.mxu0 %v363
      %409 = vmatpush.msra.mxu0 %v240
      %410 = vmatmul.f32.gmra.mxu0 %v348
      %v411 = vpop.f32.mrf.mxu0
      %v412 = vadd.f32 %v336, %v411
      %413 = vmatmul.f32.gmra.mxu0 %v351
      %v414 = vpop.f32.mrf.mxu0
      %v415 = vadd.f32 %v339, %v414
      %416 = vmatmul.f32.gmra.mxu0 %v354
      %v417 = vpop.f32.mrf.mxu0
      %v418 = vadd.f32 %v342, %v417
      %419 = vmatmul.f32.gmra.mxu0 %v357
      %v420 = vpop.f32.mrf.mxu0
      %v421 = vadd.f32 %v345, %v420
      %422 = vdwg.mxu0
      %v423 = vsel %vm206, 1, 0
      %v424 = vsel %vm207, 1, 0
      %vm425 = vcmp.eq.s32.totalorder %v423, 1
      %vm426 = vcmp.eq.s32.totalorder %v424, 1
      %427 = vrot.lane.b32.xlu0 %v171, 111
      %v428 = vpop.permute.xlu0 %427
      %429 = vrot.lane.b32.xlu0 %v172, 111
      %v430 = vpop.permute.xlu0 %429
      %431 = vrot.lane.b32.xlu0 %v173, 111
      %v432 = vpop.permute.xlu0 %431
      %433 = vrot.lane.b32.xlu0 %v174, 111
      %v434 = vpop.permute.xlu0 %433
      %435 = vrot.lane.b32.xlu0 %v175, 111
      %v436 = vpop.permute.xlu0 %435
      %437 = vrot.lane.b32.xlu0 %v176, 111
      %v438 = vpop.permute.xlu0 %437
      %vm439 = vcmask 908288
      %v440 = vsel %vm439, %v428, %v430
      %v441 = vsel %vm439, %v430, %v432
      %v442 = vsel %vm439, %v434, %v436
      %v443 = vsel %vm439, %v436, %v438
      %v448 = vsel %vm425, %v440, 0.0
      %v449 = vsel %vm426, %v441, 0.0
      %v450 = vsel %vm425, %v442, 0.0
      %v451 = vsel %vm426, %v443, 0.0
      %s452 = scalar_lea.vmem %s1, 64
      %v453 = vld [vmem:[%s452] sm:$0xff]
      %v454 = vld [vmem:[%s452 + $0x8] sm:$0xff]
      %v455 = vld [vmem:[%s452 + $0x10] sm:$0xff]
      %v456 = vld [vmem:[%s452 + $0x18] sm:$0xff]
      %v458 = vsel %vm271, %v453, 0
      %v461 = vsel %vm271, %v454, 0
      %v464 = vsel %vm271, %v455, 0
      %v467 = vsel %vm271, %v456, 0
      %v470 = vsel %vm284, %v450, 0
      %v473 = vsel %vm284, %v451, 0
      %475 = vmatpush.msra.mxu0 0.0
      %476 = vmatpush.msra.mxu0 0.0
      %477 = vmatpush.msra.mxu0 0.0
      %478 = vmatpush.msra.mxu0 0.0
      %479 = vmatpush.msra.mxu0 0.0
      %480 = vmatpush.msra.mxu0 0.0
      %481 = vmatpush.msra.mxu0 0.0
      %482 = vmatpush.msra.mxu0 0.0
      %483 = vmatpush.msra.mxu0 0.0
      %484 = vmatpush.msra.mxu0 0.0
      %485 = vmatpush.msra.mxu0 0.0
      %486 = vmatpush.msra.mxu0 0.0
      %487 = vmatpush.msra.mxu0 0.0
      %488 = vmatpush.msra.mxu0 0.0
      %489 = vmatpush.msra.mxu0 %v470
      %490 = vmatpush.msra.mxu0 %v448
      %491 = vmatmul.f32.gmra.mxu0 %v458
      %v492 = vpop.f32.mrf.mxu0
      %v493 = vadd.f32 0.0, %v492
      %494 = vmatmul.f32.gmra.mxu0 %v461
      %v495 = vpop.f32.mrf.mxu0
      %v496 = vadd.f32 0.0, %v495
      %497 = vmatmul.f32.gmra.mxu0 %v464
      %v498 = vpop.f32.mrf.mxu0
      %v499 = vadd.f32 0.0, %v498
      %500 = vmatmul.f32.gmra.mxu0 %v467
      %v501 = vpop.f32.mrf.mxu0
      %v502 = vadd.f32 0.0, %v501
      %503 = vdwg.mxu0
      %504 = vmatpush.msra.mxu0 0.0
      %505 = vmatpush.msra.mxu0 0.0
      %506 = vmatpush.msra.mxu0 0.0
      %507 = vmatpush.msra.mxu0 0.0
      %508 = vmatpush.msra.mxu0 0.0
      %509 = vmatpush.msra.mxu0 0.0
      %510 = vmatpush.msra.mxu0 0.0
      %511 = vmatpush.msra.mxu0 0.0
      %512 = vmatpush.msra.mxu0 0.0
      %513 = vmatpush.msra.mxu0 0.0
      %514 = vmatpush.msra.mxu0 0.0
      %515 = vmatpush.msra.mxu0 0.0
      %516 = vmatpush.msra.mxu0 0.0
      %517 = vmatpush.msra.mxu0 0.0
      %518 = vmatpush.msra.mxu0 %v473
      %519 = vmatpush.msra.mxu0 %v449
      %520 = vmatmul.f32.gmra.mxu0 %v458
      %v521 = vpop.f32.mrf.mxu0
      %v522 = vadd.f32 0.0, %v521
      %523 = vmatmul.f32.gmra.mxu0 %v461
      %v524 = vpop.f32.mrf.mxu0
      %v525 = vadd.f32 0.0, %v524
      %526 = vmatmul.f32.gmra.mxu0 %v464
      %v527 = vpop.f32.mrf.mxu0
      %v528 = vadd.f32 0.0, %v527
      %529 = vmatmul.f32.gmra.mxu0 %v467
      %v530 = vpop.f32.mrf.mxu0
      %v531 = vadd.f32 0.0, %v530
      %532 = vdwg.mxu0
      %v533 = vadd.f32 %v383, %v493
      %v534 = vadd.f32 %v412, %v522
      %v535 = vadd.f32 %v386, %v496
      %v536 = vadd.f32 %v415, %v525
      %v537 = vadd.f32 %v389, %v499
      %v538 = vadd.f32 %v418, %v528
      %v539 = vadd.f32 %v392, %v502
      %v540 = vadd.f32 %v421, %v531
      %541 = vrot.lane.b32.xlu0 %v171, 97
      %v542 = vpop.permute.xlu0 %541
      %543 = vrot.lane.b32.xlu0 %v172, 97
      %v544 = vpop.permute.xlu0 %543
      %545 = vrot.lane.b32.xlu0 %v173, 97
      %v546 = vpop.permute.xlu0 %545
      %547 = vrot.lane.b32.xlu0 %v174, 97
      %v548 = vpop.permute.xlu0 %547
      %549 = vrot.lane.b32.xlu0 %v175, 97
      %v550 = vpop.permute.xlu0 %549
      %551 = vrot.lane.b32.xlu0 %v176, 97
      %v552 = vpop.permute.xlu0 %551
      %vm553 = vcmask 793600
      %v554 = vsel %vm553, %v542, %v544
      %v555 = vsel %vm553, %v544, %v546
      %v556 = vsel %vm553, %v548, %v550
      %v557 = vsel %vm553, %v550, %v552
      %v562 = vsel %vm210, %v554, 0.0
      %v563 = vsel %vm211, %v555, 0.0
      %v564 = vsel %vm210, %v556, 0.0
      %v565 = vsel %vm211, %v557, 0.0
      %s566 = scalar_lea.vmem %s1, 96
      %v567 = vld [vmem:[%s566] sm:$0xff]
      %v568 = vld [vmem:[%s566 + $0x8] sm:$0xff]
      %v569 = vld [vmem:[%s566 + $0x10] sm:$0xff]
      %v570 = vld [vmem:[%s566 + $0x18] sm:$0xff]
      %v572 = vsel %vm271, %v567, 0
      %v575 = vsel %vm271, %v568, 0
      %v578 = vsel %vm271, %v569, 0
      %v581 = vsel %vm271, %v570, 0
      %v584 = vsel %vm284, %v564, 0
      %v587 = vsel %vm284, %v565, 0
      %589 = vmatpush.msra.mxu0 0.0
      %590 = vmatpush.msra.mxu0 0.0
      %591 = vmatpush.msra.mxu0 0.0
      %592 = vmatpush.msra.mxu0 0.0
      %593 = vmatpush.msra.mxu0 0.0
      %594 = vmatpush.msra.mxu0 0.0
      %595 = vmatpush.msra.mxu0 0.0
      %596 = vmatpush.msra.mxu0 0.0
      %597 = vmatpush.msra.mxu0 0.0
      %598 = vmatpush.msra.mxu0 0.0
      %599 = vmatpush.msra.mxu0 0.0
      %600 = vmatpush.msra.mxu0 0.0
      %601 = vmatpush.msra.mxu0 0.0
      %602 = vmatpush.msra.mxu0 0.0
      %603 = vmatpush.msra.mxu0 %v584
      %604 = vmatpush.msra.mxu0 %v562
      %605 = vmatmul.f32.gmra.mxu0 %v572
      %v606 = vpop.f32.mrf.mxu0
      %v607 = vadd.f32 0.0, %v606
      %608 = vmatmul.f32.gmra.mxu0 %v575
      %v609 = vpop.f32.mrf.mxu0
      %v610 = vadd.f32 0.0, %v609
      %611 = vmatmul.f32.gmra.mxu0 %v578
      %v612 = vpop.f32.mrf.mxu0
      %v613 = vadd.f32 0.0, %v612
      %614 = vmatmul.f32.gmra.mxu0 %v581
      %v615 = vpop.f32.mrf.mxu0
      %v616 = vadd.f32 0.0, %v615
      %617 = vdwg.mxu0
      %618 = vmatpush.msra.mxu0 0.0
      %619 = vmatpush.msra.mxu0 0.0
      %620 = vmatpush.msra.mxu0 0.0
      %621 = vmatpush.msra.mxu0 0.0
      %622 = vmatpush.msra.mxu0 0.0
      %623 = vmatpush.msra.mxu0 0.0
      %624 = vmatpush.msra.mxu0 0.0
      %625 = vmatpush.msra.mxu0 0.0
      %626 = vmatpush.msra.mxu0 0.0
      %627 = vmatpush.msra.mxu0 0.0
      %628 = vmatpush.msra.mxu0 0.0
      %629 = vmatpush.msra.mxu0 0.0
      %630 = vmatpush.msra.mxu0 0.0
      %631 = vmatpush.msra.mxu0 0.0
      %632 = vmatpush.msra.mxu0 %v587
      %633 = vmatpush.msra.mxu0 %v563
      %634 = vmatmul.f32.gmra.mxu0 %v572
      %v635 = vpop.f32.mrf.mxu0
      %v636 = vadd.f32 0.0, %v635
      %637 = vmatmul.f32.gmra.mxu0 %v575
      %v638 = vpop.f32.mrf.mxu0
      %v639 = vadd.f32 0.0, %v638
      %640 = vmatmul.f32.gmra.mxu0 %v578
      %v641 = vpop.f32.mrf.mxu0
      %v642 = vadd.f32 0.0, %v641
      %643 = vmatmul.f32.gmra.mxu0 %v581
      %v644 = vpop.f32.mrf.mxu0
      %v645 = vadd.f32 0.0, %v644
      %646 = vdwg.mxu0
      %v647 = vadd.f32 %v533, %v607
      %v648 = vadd.f32 %v534, %v636
      %v649 = vadd.f32 %v535, %v610
      %v650 = vadd.f32 %v536, %v639
      %v651 = vadd.f32 %v537, %v613
      %v652 = vadd.f32 %v538, %v642
      %v653 = vadd.f32 %v539, %v616
      %v654 = vadd.f32 %v540, %v645
      %s655 = scalar_lea.vmem %s1, 128
      %v656 = vld [vmem:[%s655] sm:$0xff]
      %v657 = vld [vmem:[%s655 + $0x8] sm:$0xff]
      %v658 = vld [vmem:[%s655 + $0x10] sm:$0xff]
      %v659 = vld [vmem:[%s655 + $0x18] sm:$0xff]
      %660 = vrot.lane.b32.xlu0 %v171, 96
      %v661 = vpop.permute.xlu0 %660
      %662 = vrot.lane.b32.xlu0 %v172, 96
      %v663 = vpop.permute.xlu0 %662
      %664 = vrot.lane.b32.xlu0 %v173, 96
      %v665 = vpop.permute.xlu0 %664
      %666 = vrot.lane.b32.xlu0 %v174, 96
      %v667 = vpop.permute.xlu0 %666
      %668 = vrot.lane.b32.xlu0 %v175, 96
      %v669 = vpop.permute.xlu0 %668
      %670 = vrot.lane.b32.xlu0 %v176, 96
      %v671 = vpop.permute.xlu0 %670
      %vm672 = vcmask 785408
      %v673 = vsel %vm672, %v661, %v663
      %v674 = vsel %vm672, %v663, %v665
      %v675 = vsel %vm672, %v667, %v669
      %v676 = vsel %vm672, %v669, %v671
      %v680 = vsel %vm271, %v656, 0
      %v683 = vsel %vm271, %v657, 0
      %v686 = vsel %vm271, %v658, 0
      %v689 = vsel %vm271, %v659, 0
      %v691 = vsel %vm284, %v675, 0
      %v693 = vsel %vm284, %v676, 0
      %695 = vmatpush.msra.mxu0 0.0
      %696 = vmatpush.msra.mxu0 0.0
      %697 = vmatpush.msra.mxu0 0.0
      %698 = vmatpush.msra.mxu0 0.0
      %699 = vmatpush.msra.mxu0 0.0
      %700 = vmatpush.msra.mxu0 0.0
      %701 = vmatpush.msra.mxu0 0.0
      %702 = vmatpush.msra.mxu0 0.0
      %703 = vmatpush.msra.mxu0 0.0
      %704 = vmatpush.msra.mxu0 0.0
      %705 = vmatpush.msra.mxu0 0.0
      %706 = vmatpush.msra.mxu0 0.0
      %707 = vmatpush.msra.mxu0 0.0
      %708 = vmatpush.msra.mxu0 0.0
      %709 = vmatpush.msra.mxu0 %v691
      %710 = vmatpush.msra.mxu0 %v673
      %711 = vmatmul.f32.gmra.mxu0 %v680
      %v712 = vpop.f32.mrf.mxu0
      %v713 = vadd.f32 0.0, %v712
      %714 = vmatmul.f32.gmra.mxu0 %v683
      %v715 = vpop.f32.mrf.mxu0
      %v716 = vadd.f32 0.0, %v715
      %717 = vmatmul.f32.gmra.mxu0 %v686
      %v718 = vpop.f32.mrf.mxu0
      %v719 = vadd.f32 0.0, %v718
      %720 = vmatmul.f32.gmra.mxu0 %v689
      %v721 = vpop.f32.mrf.mxu0
      %v722 = vadd.f32 0.0, %v721
      %723 = vdwg.mxu0
      %724 = vmatpush.msra.mxu0 0.0
      %725 = vmatpush.msra.mxu0 0.0
      %726 = vmatpush.msra.mxu0 0.0
      %727 = vmatpush.msra.mxu0 0.0
      %728 = vmatpush.msra.mxu0 0.0
      %729 = vmatpush.msra.mxu0 0.0
      %730 = vmatpush.msra.mxu0 0.0
      %731 = vmatpush.msra.mxu0 0.0
      %732 = vmatpush.msra.mxu0 0.0
      %733 = vmatpush.msra.mxu0 0.0
      %734 = vmatpush.msra.mxu0 0.0
      %735 = vmatpush.msra.mxu0 0.0
      %736 = vmatpush.msra.mxu0 0.0
      %737 = vmatpush.msra.mxu0 0.0
      %738 = vmatpush.msra.mxu0 %v693
      %739 = vmatpush.msra.mxu0 %v674
      %740 = vmatmul.f32.gmra.mxu0 %v680
      %v741 = vpop.f32.mrf.mxu0
      %v742 = vadd.f32 0.0, %v741
      %743 = vmatmul.f32.gmra.mxu0 %v683
      %v744 = vpop.f32.mrf.mxu0
      %v745 = vadd.f32 0.0, %v744
      %746 = vmatmul.f32.gmra.mxu0 %v686
      %v747 = vpop.f32.mrf.mxu0
      %v748 = vadd.f32 0.0, %v747
      %749 = vmatmul.f32.gmra.mxu0 %v689
      %v750 = vpop.f32.mrf.mxu0
      %v751 = vadd.f32 0.0, %v750
      %752 = vdwg.mxu0
      %v753 = vadd.f32 %v647, %v713
      %v754 = vadd.f32 %v648, %v742
      %v755 = vadd.f32 %v649, %v716
      %v756 = vadd.f32 %v650, %v745
      %v757 = vadd.f32 %v651, %v719
      %v758 = vadd.f32 %v652, %v748
      %v759 = vadd.f32 %v653, %v722
      %v760 = vadd.f32 %v654, %v751
      %761 = vrot.lane.b32.xlu0 %v171, 95
      %v762 = vpop.permute.xlu0 %761
      %763 = vrot.lane.b32.xlu0 %v172, 95
      %v764 = vpop.permute.xlu0 %763
      %765 = vrot.lane.b32.xlu0 %v173, 95
      %v766 = vpop.permute.xlu0 %765
      %767 = vrot.lane.b32.xlu0 %v174, 95
      %v768 = vpop.permute.xlu0 %767
      %769 = vrot.lane.b32.xlu0 %v175, 95
      %v770 = vpop.permute.xlu0 %769
      %771 = vrot.lane.b32.xlu0 %v176, 95
      %v772 = vpop.permute.xlu0 %771
      %vm773 = vcmask 777216
      %v774 = vsel %vm773, %v762, %v764
      %v775 = vsel %vm773, %v764, %v766
      %v776 = vsel %vm773, %v768, %v770
      %v777 = vsel %vm773, %v770, %v772
      %v782 = vsel %vm425, %v774, 0.0
      %v783 = vsel %vm426, %v775, 0.0
      %v784 = vsel %vm425, %v776, 0.0
      %v785 = vsel %vm426, %v777, 0.0
      %s786 = scalar_lea.vmem %s1, 160
      %v787 = vld [vmem:[%s786] sm:$0xff]
      %v788 = vld [vmem:[%s786 + $0x8] sm:$0xff]
      %v789 = vld [vmem:[%s786 + $0x10] sm:$0xff]
      %v790 = vld [vmem:[%s786 + $0x18] sm:$0xff]
      %v792 = vsel %vm271, %v787, 0
      %v795 = vsel %vm271, %v788, 0
      %v798 = vsel %vm271, %v789, 0
      %v801 = vsel %vm271, %v790, 0
      %v804 = vsel %vm284, %v784, 0
      %v807 = vsel %vm284, %v785, 0
      %809 = vmatpush.msra.mxu0 0.0
      %810 = vmatpush.msra.mxu0 0.0
      %811 = vmatpush.msra.mxu0 0.0
      %812 = vmatpush.msra.mxu0 0.0
      %813 = vmatpush.msra.mxu0 0.0
      %814 = vmatpush.msra.mxu0 0.0
      %815 = vmatpush.msra.mxu0 0.0
      %816 = vmatpush.msra.mxu0 0.0
      %817 = vmatpush.msra.mxu0 0.0
      %818 = vmatpush.msra.mxu0 0.0
      %819 = vmatpush.msra.mxu0 0.0
      %820 = vmatpush.msra.mxu0 0.0
      %821 = vmatpush.msra.mxu0 0.0
      %822 = vmatpush.msra.mxu0 0.0
      %823 = vmatpush.msra.mxu0 %v804
      %824 = vmatpush.msra.mxu0 %v782
      %825 = vmatmul.f32.gmra.mxu0 %v792
      %v826 = vpop.f32.mrf.mxu0
      %v827 = vadd.f32 0.0, %v826
      %828 = vmatmul.f32.gmra.mxu0 %v795
      %v829 = vpop.f32.mrf.mxu0
      %v830 = vadd.f32 0.0, %v829
      %831 = vmatmul.f32.gmra.mxu0 %v798
      %v832 = vpop.f32.mrf.mxu0
      %v833 = vadd.f32 0.0, %v832
      %834 = vmatmul.f32.gmra.mxu0 %v801
      %v835 = vpop.f32.mrf.mxu0
      %v836 = vadd.f32 0.0, %v835
      %837 = vdwg.mxu0
      %838 = vmatpush.msra.mxu0 0.0
      %839 = vmatpush.msra.mxu0 0.0
      %840 = vmatpush.msra.mxu0 0.0
      %841 = vmatpush.msra.mxu0 0.0
      %842 = vmatpush.msra.mxu0 0.0
      %843 = vmatpush.msra.mxu0 0.0
      %844 = vmatpush.msra.mxu0 0.0
      %845 = vmatpush.msra.mxu0 0.0
      %846 = vmatpush.msra.mxu0 0.0
      %847 = vmatpush.msra.mxu0 0.0
      %848 = vmatpush.msra.mxu0 0.0
      %849 = vmatpush.msra.mxu0 0.0
      %850 = vmatpush.msra.mxu0 0.0
      %851 = vmatpush.msra.mxu0 0.0
      %852 = vmatpush.msra.mxu0 %v807
      %853 = vmatpush.msra.mxu0 %v783
      %854 = vmatmul.f32.gmra.mxu0 %v792
      %v855 = vpop.f32.mrf.mxu0
      %v856 = vadd.f32 0.0, %v855
      %857 = vmatmul.f32.gmra.mxu0 %v795
      %v858 = vpop.f32.mrf.mxu0
      %v859 = vadd.f32 0.0, %v858
      %860 = vmatmul.f32.gmra.mxu0 %v798
      %v861 = vpop.f32.mrf.mxu0
      %v862 = vadd.f32 0.0, %v861
      %863 = vmatmul.f32.gmra.mxu0 %v801
      %v864 = vpop.f32.mrf.mxu0
      %v865 = vadd.f32 0.0, %v864
      %866 = vdwg.mxu0
      %v867 = vadd.f32 %v753, %v827
      %v868 = vadd.f32 %v754, %v856
      %v869 = vadd.f32 %v755, %v830
      %v870 = vadd.f32 %v756, %v859
      %v871 = vadd.f32 %v757, %v833
      %v872 = vadd.f32 %v758, %v862
      %v873 = vadd.f32 %v759, %v836
      %v874 = vadd.f32 %v760, %v865
      %875 = vrot.lane.b32.xlu0 %v171, 81
      %v876 = vpop.permute.xlu0 %875
      %877 = vrot.lane.b32.xlu0 %v172, 81
      %v878 = vpop.permute.xlu0 %877
      %879 = vrot.lane.b32.xlu0 %v173, 81
      %v880 = vpop.permute.xlu0 %879
      %881 = vrot.lane.b32.xlu0 %v174, 81
      %v882 = vpop.permute.xlu0 %881
      %883 = vrot.lane.b32.xlu0 %v175, 81
      %v884 = vpop.permute.xlu0 %883
      %885 = vrot.lane.b32.xlu0 %v176, 81
      %v886 = vpop.permute.xlu0 %885
      %vm887 = vcmask 662528
      %v888 = vsel %vm887, %v876, %v878
      %v889 = vsel %vm887, %v878, %v880
      %v890 = vsel %vm887, %v882, %v884
      %v891 = vsel %vm887, %v884, %v886
      %v896 = vsel %vm210, %v888, 0.0
      %v897 = vsel %vm211, %v889, 0.0
      %v898 = vsel %vm210, %v890, 0.0
      %v899 = vsel %vm211, %v891, 0.0
      %s900 = scalar_lea.vmem %s1, 192
      %v901 = vld [vmem:[%s900] sm:$0xff]
      %v902 = vld [vmem:[%s900 + $0x8] sm:$0xff]
      %v903 = vld [vmem:[%s900 + $0x10] sm:$0xff]
      %v904 = vld [vmem:[%s900 + $0x18] sm:$0xff]
      %v906 = vsel %vm271, %v901, 0
      %v909 = vsel %vm271, %v902, 0
      %v912 = vsel %vm271, %v903, 0
      %v915 = vsel %vm271, %v904, 0
      %v918 = vsel %vm284, %v898, 0
      %v921 = vsel %vm284, %v899, 0
      %923 = vmatpush.msra.mxu0 0.0
      %924 = vmatpush.msra.mxu0 0.0
      %925 = vmatpush.msra.mxu0 0.0
      %926 = vmatpush.msra.mxu0 0.0
      %927 = vmatpush.msra.mxu0 0.0
      %928 = vmatpush.msra.mxu0 0.0
      %929 = vmatpush.msra.mxu0 0.0
      %930 = vmatpush.msra.mxu0 0.0
      %931 = vmatpush.msra.mxu0 0.0
      %932 = vmatpush.msra.mxu0 0.0
      %933 = vmatpush.msra.mxu0 0.0
      %934 = vmatpush.msra.mxu0 0.0
      %935 = vmatpush.msra.mxu0 0.0
      %936 = vmatpush.msra.mxu0 0.0
      %937 = vmatpush.msra.mxu0 %v918
      %938 = vmatpush.msra.mxu0 %v896
      %939 = vmatmul.f32.gmra.mxu0 %v906
      %v940 = vpop.f32.mrf.mxu0
      %v941 = vadd.f32 0.0, %v940
      %942 = vmatmul.f32.gmra.mxu0 %v909
      %v943 = vpop.f32.mrf.mxu0
      %v944 = vadd.f32 0.0, %v943
      %945 = vmatmul.f32.gmra.mxu0 %v912
      %v946 = vpop.f32.mrf.mxu0
      %v947 = vadd.f32 0.0, %v946
      %948 = vmatmul.f32.gmra.mxu0 %v915
      %v949 = vpop.f32.mrf.mxu0
      %v950 = vadd.f32 0.0, %v949
      %951 = vdwg.mxu0
      %952 = vmatpush.msra.mxu0 0.0
      %953 = vmatpush.msra.mxu0 0.0
      %954 = vmatpush.msra.mxu0 0.0
      %955 = vmatpush.msra.mxu0 0.0
      %956 = vmatpush.msra.mxu0 0.0
      %957 = vmatpush.msra.mxu0 0.0
      %958 = vmatpush.msra.mxu0 0.0
      %959 = vmatpush.msra.mxu0 0.0
      %960 = vmatpush.msra.mxu0 0.0
      %961 = vmatpush.msra.mxu0 0.0
      %962 = vmatpush.msra.mxu0 0.0
      %963 = vmatpush.msra.mxu0 0.0
      %964 = vmatpush.msra.mxu0 0.0
      %965 = vmatpush.msra.mxu0 0.0
      %966 = vmatpush.msra.mxu0 %v921
      %967 = vmatpush.msra.mxu0 %v897
      %968 = vmatmul.f32.gmra.mxu0 %v906
      %v969 = vpop.f32.mrf.mxu0
      %v970 = vadd.f32 0.0, %v969
      %971 = vmatmul.f32.gmra.mxu0 %v909
      %v972 = vpop.f32.mrf.mxu0
      %v973 = vadd.f32 0.0, %v972
      %974 = vmatmul.f32.gmra.mxu0 %v912
      %v975 = vpop.f32.mrf.mxu0
      %v976 = vadd.f32 0.0, %v975
      %977 = vmatmul.f32.gmra.mxu0 %v915
      %v978 = vpop.f32.mrf.mxu0
      %v979 = vadd.f32 0.0, %v978
      %980 = vdwg.mxu0
      %v981 = vadd.f32 %v867, %v941
      %v982 = vadd.f32 %v868, %v970
      %v983 = vadd.f32 %v869, %v944
      %v984 = vadd.f32 %v870, %v973
      %v985 = vadd.f32 %v871, %v947
      %v986 = vadd.f32 %v872, %v976
      %v987 = vadd.f32 %v873, %v950
      %v988 = vadd.f32 %v874, %v979
      %s989 = scalar_lea.vmem %s1, 224
      %v990 = vld [vmem:[%s989] sm:$0xff]
      %v991 = vld [vmem:[%s989 + $0x8] sm:$0xff]
      %v992 = vld [vmem:[%s989 + $0x10] sm:$0xff]
      %v993 = vld [vmem:[%s989 + $0x18] sm:$0xff]
      %994 = vrot.lane.b32.xlu0 %v171, 80
      %v995 = vpop.permute.xlu0 %994
      %996 = vrot.lane.b32.xlu0 %v172, 80
      %v997 = vpop.permute.xlu0 %996
      %998 = vrot.lane.b32.xlu0 %v173, 80
      %v999 = vpop.permute.xlu0 %998
      %1000 = vrot.lane.b32.xlu0 %v174, 80
      %v1001 = vpop.permute.xlu0 %1000
      %1002 = vrot.lane.b32.xlu0 %v175, 80
      %v1003 = vpop.permute.xlu0 %1002
      %1004 = vrot.lane.b32.xlu0 %v176, 80
      %v1005 = vpop.permute.xlu0 %1004
      %vm1006 = vcmask 654336
      %v1007 = vsel %vm1006, %v995, %v997
      %v1008 = vsel %vm1006, %v997, %v999
      %v1009 = vsel %vm1006, %v1001, %v1003
      %v1010 = vsel %vm1006, %v1003, %v1005
      %v1014 = vsel %vm271, %v990, 0
      %v1017 = vsel %vm271, %v991, 0
      %v1020 = vsel %vm271, %v992, 0
      %v1023 = vsel %vm271, %v993, 0
      %v1025 = vsel %vm284, %v1009, 0
      %v1027 = vsel %vm284, %v1010, 0
      %1029 = vmatpush.msra.mxu0 0.0
      %1030 = vmatpush.msra.mxu0 0.0
      %1031 = vmatpush.msra.mxu0 0.0
      %1032 = vmatpush.msra.mxu0 0.0
      %1033 = vmatpush.msra.mxu0 0.0
      %1034 = vmatpush.msra.mxu0 0.0
      %1035 = vmatpush.msra.mxu0 0.0
      %1036 = vmatpush.msra.mxu0 0.0
      %1037 = vmatpush.msra.mxu0 0.0
      %1038 = vmatpush.msra.mxu0 0.0
      %1039 = vmatpush.msra.mxu0 0.0
      %1040 = vmatpush.msra.mxu0 0.0
      %1041 = vmatpush.msra.mxu0 0.0
      %1042 = vmatpush.msra.mxu0 0.0
      %1043 = vmatpush.msra.mxu0 %v1025
      %1044 = vmatpush.msra.mxu0 %v1007
      %1045 = vmatmul.f32.gmra.mxu0 %v1014
      %v1046 = vpop.f32.mrf.mxu0
      %v1047 = vadd.f32 0.0, %v1046
      %1048 = vmatmul.f32.gmra.mxu0 %v1017
      %v1049 = vpop.f32.mrf.mxu0
      %v1050 = vadd.f32 0.0, %v1049
      %1051 = vmatmul.f32.gmra.mxu0 %v1020
      %v1052 = vpop.f32.mrf.mxu0
      %v1053 = vadd.f32 0.0, %v1052
      %1054 = vmatmul.f32.gmra.mxu0 %v1023
      %v1055 = vpop.f32.mrf.mxu0
      %v1056 = vadd.f32 0.0, %v1055
      %1057 = vdwg.mxu0
      %1058 = vmatpush.msra.mxu0 0.0
      %1059 = vmatpush.msra.mxu0 0.0
      %1060 = vmatpush.msra.mxu0 0.0
      %1061 = vmatpush.msra.mxu0 0.0
      %1062 = vmatpush.msra.mxu0 0.0
      %1063 = vmatpush.msra.mxu0 0.0
      %1064 = vmatpush.msra.mxu0 0.0
      %1065 = vmatpush.msra.mxu0 0.0
      %1066 = vmatpush.msra.mxu0 0.0
      %1067 = vmatpush.msra.mxu0 0.0
      %1068 = vmatpush.msra.mxu0 0.0
      %1069 = vmatpush.msra.mxu0 0.0
      %1070 = vmatpush.msra.mxu0 0.0
      %1071 = vmatpush.msra.mxu0 0.0
      %1072 = vmatpush.msra.mxu0 %v1027
      %1073 = vmatpush.msra.mxu0 %v1008
      %1074 = vmatmul.f32.gmra.mxu0 %v1014
      %v1075 = vpop.f32.mrf.mxu0
      %v1076 = vadd.f32 0.0, %v1075
      %1077 = vmatmul.f32.gmra.mxu0 %v1017
      %v1078 = vpop.f32.mrf.mxu0
      %v1079 = vadd.f32 0.0, %v1078
      %1080 = vmatmul.f32.gmra.mxu0 %v1020
      %v1081 = vpop.f32.mrf.mxu0
      %v1082 = vadd.f32 0.0, %v1081
      %1083 = vmatmul.f32.gmra.mxu0 %v1023
      %v1084 = vpop.f32.mrf.mxu0
      %v1085 = vadd.f32 0.0, %v1084
      %1086 = vdwg.mxu0
      %v1087 = vadd.f32 %v981, %v1047
      %v1088 = vadd.f32 %v982, %v1076
      %v1089 = vadd.f32 %v983, %v1050
      %v1090 = vadd.f32 %v984, %v1079
      %v1091 = vadd.f32 %v985, %v1053
      %v1092 = vadd.f32 %v986, %v1082
      %v1093 = vadd.f32 %v987, %v1056
      %v1094 = vadd.f32 %v988, %v1085
      %1095 = vrot.lane.b32.xlu0 %v171, 79
      %v1096 = vpop.permute.xlu0 %1095
      %1097 = vrot.lane.b32.xlu0 %v172, 79
      %v1098 = vpop.permute.xlu0 %1097
      %1099 = vrot.lane.b32.xlu0 %v173, 79
      %v1100 = vpop.permute.xlu0 %1099
      %1101 = vrot.lane.b32.xlu0 %v174, 79
      %v1102 = vpop.permute.xlu0 %1101
      %1103 = vrot.lane.b32.xlu0 %v175, 79
      %v1104 = vpop.permute.xlu0 %1103
      %1105 = vrot.lane.b32.xlu0 %v176, 79
      %v1106 = vpop.permute.xlu0 %1105
      %vm1107 = vcmask 646144
      %v1108 = vsel %vm1107, %v1096, %v1098
      %v1109 = vsel %vm1107, %v1098, %v1100
      %v1110 = vsel %vm1107, %v1102, %v1104
      %v1111 = vsel %vm1107, %v1104, %v1106
      %v1116 = vsel %vm425, %v1108, 0.0
      %v1117 = vsel %vm426, %v1109, 0.0
      %v1118 = vsel %vm425, %v1110, 0.0
      %v1119 = vsel %vm426, %v1111, 0.0
      %s1120 = scalar_lea.vmem %s1, 256
      %v1121 = vld [vmem:[%s1120] sm:$0xff]
      %v1122 = vld [vmem:[%s1120 + $0x8] sm:$0xff]
      %v1123 = vld [vmem:[%s1120 + $0x10] sm:$0xff]
      %v1124 = vld [vmem:[%s1120 + $0x18] sm:$0xff]
      %v1126 = vsel %vm271, %v1121, 0
      %v1129 = vsel %vm271, %v1122, 0
      %v1132 = vsel %vm271, %v1123, 0
      %v1135 = vsel %vm271, %v1124, 0
      %v1138 = vsel %vm284, %v1118, 0
      %v1141 = vsel %vm284, %v1119, 0
      %1143 = vmatpush.msra.mxu0 0.0
      %1144 = vmatpush.msra.mxu0 0.0
      %1145 = vmatpush.msra.mxu0 0.0
      %1146 = vmatpush.msra.mxu0 0.0
      %1147 = vmatpush.msra.mxu0 0.0
      %1148 = vmatpush.msra.mxu0 0.0
      %1149 = vmatpush.msra.mxu0 0.0
      %1150 = vmatpush.msra.mxu0 0.0
      %1151 = vmatpush.msra.mxu0 0.0
      %1152 = vmatpush.msra.mxu0 0.0
      %1153 = vmatpush.msra.mxu0 0.0
      %1154 = vmatpush.msra.mxu0 0.0
      %1155 = vmatpush.msra.mxu0 0.0
      %1156 = vmatpush.msra.mxu0 0.0
      %1157 = vmatpush.msra.mxu0 %v1138
      %1158 = vmatpush.msra.mxu0 %v1116
      %1159 = vmatmul.f32.gmra.mxu0 %v1126
      %v1160 = vpop.f32.mrf.mxu0
      %v1161 = vadd.f32 0.0, %v1160
      %1162 = vmatmul.f32.gmra.mxu0 %v1129
      %v1163 = vpop.f32.mrf.mxu0
      %v1164 = vadd.f32 0.0, %v1163
      %1165 = vmatmul.f32.gmra.mxu0 %v1132
      %v1166 = vpop.f32.mrf.mxu0
      %v1167 = vadd.f32 0.0, %v1166
      %1168 = vmatmul.f32.gmra.mxu0 %v1135
      %v1169 = vpop.f32.mrf.mxu0
      %v1170 = vadd.f32 0.0, %v1169
      %1171 = vdwg.mxu0
      %1172 = vmatpush.msra.mxu0 0.0
      %1173 = vmatpush.msra.mxu0 0.0
      %1174 = vmatpush.msra.mxu0 0.0
      %1175 = vmatpush.msra.mxu0 0.0
      %1176 = vmatpush.msra.mxu0 0.0
      %1177 = vmatpush.msra.mxu0 0.0
      %1178 = vmatpush.msra.mxu0 0.0
      %1179 = vmatpush.msra.mxu0 0.0
      %1180 = vmatpush.msra.mxu0 0.0
      %1181 = vmatpush.msra.mxu0 0.0
      %1182 = vmatpush.msra.mxu0 0.0
      %1183 = vmatpush.msra.mxu0 0.0
      %1184 = vmatpush.msra.mxu0 0.0
      %1185 = vmatpush.msra.mxu0 0.0
      %1186 = vmatpush.msra.mxu0 %v1141
      %1187 = vmatpush.msra.mxu0 %v1117
      %1188 = vmatmul.f32.gmra.mxu0 %v1126
      %v1189 = vpop.f32.mrf.mxu0
      %v1190 = vadd.f32 0.0, %v1189
      %1191 = vmatmul.f32.gmra.mxu0 %v1129
      %v1192 = vpop.f32.mrf.mxu0
      %v1193 = vadd.f32 0.0, %v1192
      %1194 = vmatmul.f32.gmra.mxu0 %v1132
      %v1195 = vpop.f32.mrf.mxu0
      %v1196 = vadd.f32 0.0, %v1195
      %1197 = vmatmul.f32.gmra.mxu0 %v1135
      %v1198 = vpop.f32.mrf.mxu0
      %v1199 = vadd.f32 0.0, %v1198
      %1200 = vdwg.mxu0
      %v1201 = vadd.f32 %v1087, %v1161
      %v1202 = vadd.f32 %v1088, %v1190
      %v1203 = vadd.f32 %v1089, %v1164
      %v1204 = vadd.f32 %v1090, %v1193
      %v1205 = vadd.f32 %v1091, %v1167
      %v1206 = vadd.f32 %v1092, %v1196
      %v1207 = vadd.f32 %v1093, %v1170
      %v1208 = vadd.f32 %v1094, %v1199
      %v1209 = vld [vmem:[%s2] sm:$0xff]
      %v1210 = vld [vmem:[%s2 + $0x8] sm:$0xff]
      %v1211 = vld [vmem:[%s2 + $0x10] sm:$0xff]
      %v1212 = vld [vmem:[%s2 + $0x18] sm:$0xff]
      %1214 = vset.pattern.permute.xlu0 0
      %1215 = vperm.xlu0 %1214, %v1209
      %v1216 = vpop.permute.xlu0 %1215
      %1219 = vset.pattern.permute.xlu0 0
      %1220 = vperm.xlu0 %1219, %v1210
      %v1221 = vpop.permute.xlu0 %1220
      %1224 = vset.pattern.permute.xlu0 0
      %1225 = vperm.xlu0 %1224, %v1211
      %v1226 = vpop.permute.xlu0 %1225
      %1229 = vset.pattern.permute.xlu0 0
      %1230 = vperm.xlu0 %1229, %v1212
      %v1231 = vpop.permute.xlu0 %1230
      %v1233 = vadd.f32 %v1201, %v1216
      %v1234 = vadd.f32 %v1202, %v1216
      %v1235 = vadd.f32 %v1203, %v1221
      %v1236 = vadd.f32 %v1204, %v1221
      %v1237 = vadd.f32 %v1205, %v1226
      %v1238 = vadd.f32 %v1206, %v1226
      %v1239 = vadd.f32 %v1207, %v1231
      %v1240 = vadd.f32 %v1208, %v1231
      %v1241 = vmax.f32 %v1233, 0.0
      %v1242 = vmax.f32 %v1234, 0.0
      %v1243 = vmax.f32 %v1235, 0.0
      %v1244 = vmax.f32 %v1236, 0.0
      %v1245 = vmax.f32 %v1237, 0.0
      %v1246 = vmax.f32 %v1238, 0.0
      %v1247 = vmax.f32 %v1239, 0.0
      %v1248 = vmax.f32 %v1240, 0.0
      %1249 = vst [vmem:[%s170] sm:$0xff] 0.0
      %1250 = vst [vmem:[%s170 + $0x8] sm:$0xff] 0.0
      %vm1251 = vcmask 523264
      %1252 = vst.msk [vmem:[%s170 + $0x10] sm:$0xff] %vm1251, 0.0
      %1253 = vst [vmem:[%s170 + $0x18] sm:$0xff] 0.0
      %1254 = vst [vmem:[%s170 + $0x20] sm:$0xff] 0.0
      %1255 = vst.msk [vmem:[%s170 + $0x28] sm:$0xff] %vm1251, 0.0
      %1256 = vst [vmem:[%s170 + $0x30] sm:$0xff] 0.0
      %1257 = vst [vmem:[%s170 + $0x38] sm:$0xff] 0.0
      %1258 = vst.msk [vmem:[%s170 + $0x40] sm:$0xff] %vm1251, 0.0
      %1259 = vst [vmem:[%s170 + $0x48] sm:$0xff] 0.0
      %1260 = vst [vmem:[%s170 + $0x50] sm:$0xff] 0.0
      %1261 = vst.msk [vmem:[%s170 + $0x58] sm:$0xff] %vm1251, 0.0
      %1270 = vrot.lane.b32.xlu0 %v1241, 32
      %v1271 = vpop.permute.xlu0 %1270
      %1272 = vrot.lane.b32.xlu0 %v1242, 32
      %v1273 = vpop.permute.xlu0 %1272
      %1274 = vrot.lane.b32.xlu0 %v1243, 32
      %v1275 = vpop.permute.xlu0 %1274
      %1276 = vrot.lane.b32.xlu0 %v1244, 32
      %v1277 = vpop.permute.xlu0 %1276
      %1278 = vrot.lane.b32.xlu0 %v1245, 32
      %v1279 = vpop.permute.xlu0 %1278
      %1280 = vrot.lane.b32.xlu0 %v1246, 32
      %v1281 = vpop.permute.xlu0 %1280
      %1282 = vrot.lane.b32.xlu0 %v1247, 32
      %v1283 = vpop.permute.xlu0 %1282
      %1284 = vrot.lane.b32.xlu0 %v1248, 32
      %v1285 = vpop.permute.xlu0 %1284
      %vm1286 = vcmask 261120
      %v1287 = vsel %vm1286, %v1271, %v1273
      %v1288 = vsel %vm1286, %v1275, %v1277
      %v1289 = vsel %vm1286, %v1279, %v1281
      %v1290 = vsel %vm1286, %v1283, %v1285
      %vm1303 = vcmask 1047808
      %1304 = vst.msk [vmem:[%s170] sm:$0xff] %vm1303, %v1271
      %1305 = vst [vmem:[%s170 + $0x8] sm:$0xff] %v1287
      %1306 = vst.msk [vmem:[%s170 + $0x10] sm:$0xff] %vm1286, %v1273
      %1307 = vst.msk [vmem:[%s170 + $0x18] sm:$0xff] %vm1303, %v1275
      %1308 = vst [vmem:[%s170 + $0x20] sm:$0xff] %v1288
      %1309 = vst.msk [vmem:[%s170 + $0x28] sm:$0xff] %vm1286, %v1277
      %1310 = vst.msk [vmem:[%s170 + $0x30] sm:$0xff] %vm1303, %v1279
      %1311 = vst [vmem:[%s170 + $0x38] sm:$0xff] %v1289
      %1312 = vst.msk [vmem:[%s170 + $0x40] sm:$0xff] %vm1286, %v1281
      %1313 = vst.msk [vmem:[%s170 + $0x48] sm:$0xff] %vm1303, %v1283
      %1314 = vst [vmem:[%s170 + $0x50] sm:$0xff] %v1290
      %1315 = vst.msk [vmem:[%s170 + $0x58] sm:$0xff] %vm1286, %v1285
      %p1316 = scmp.lt.s32.totalorder %s14, 1
      %s1317 = scalar_select %p1316, %s14, 1
      %s1318 = smul.addr %s1317, 12
      %s1319 = smul.addr %s1318, 8
      %s1320 = scalar_lea.vmem %s3, %s1319
      // Predicated region
      $region33: #{cheby_sum_block_3dab.2} parent=31 // pred_check
        %p1321 = pneg %p100
      $region34: #{cheby_sum_block_3dab.2} parent=31 // pred_check_branch
        %1323 = sbr.rel (%p1321) target = $region36
      $region35: #{cheby_sum_block_3dab.2} parent=31 // pred_region
        _
      $region36: #{cheby_sum_block_3dab.2} parent=31 // pred_fallthru
        _
    $region32: #{cheby_sum_block_3dab.2} parent=5 // pred_fallthru
      _
    %p1324 = scmp.le.s32.totalorder 2, %s9
    // Predicated region
    $region37: #{cheby_sum_block_3dab.2} parent=5 // pred_check
      %p1325 = pneg %p1324
    $region38: #{cheby_sum_block_3dab.2} parent=5 // pred_check_branch
      %1327 = sbr.rel (%p1325) target = $region40
    $region39: #{cheby_sum_block_3dab.2} parent=5 // pred_region
      %s1328 = ssub.s32 %s9, 2
      // Predicated region
      $region41: #{cheby_sum_block_3dab.2} parent=39 // pred_check
        %p1329 = pneg %p106
      $region42: #{cheby_sum_block_3dab.2} parent=39 // pred_check_branch
        %1331 = sbr.rel (%p1329) target = $region44
      $region43: #{cheby_sum_block_3dab.2} parent=39 // pred_region
        %p1332 = scmp.lt.s32.totalorder %s15, 1
        %s1333 = scalar_select %p1332, %s15, 1
        %s1334 = smul.addr %s1333, 12
        %s1335 = smul.addr %s1334, 8
        %s1336 = scalar_lea.vmem %s3, %s1335
      $region44: #{cheby_sum_block_3dab.2} parent=39 // pred_fallthru
        _
    $region40: #{cheby_sum_block_3dab.2} parent=5 // pred_fallthru
      _
  $region6: #{cheby_sum_block_3dab.2} parent=0 // loop_footer
    %s13 = sadd.s32 1, %s9
  $region7: #{cheby_sum_block_3dab.2} parent=0 // loop_footer_branch
    %8 = sbr.rel target = $region3
  $region8: #{cheby_sum_block_3dab.2} parent=0 // loop_exit
    _

</llo_original>
